<compile_context>
chip_gen: v7x
topology: tpu7x:2x2x1
jax: 0.10.0
libtpu: 0.0.40
codegen_flags: <defaults>
</compile_context>

<pallas_src>
import functools

import jax
import jax.numpy as jnp
from jax.experimental import pallas as pl
from jax.experimental.pallas import tpu as pltpu

# Logical sizes of the torch module.
IN_F, H1_F, H2_F, OUT_F = 28 * 28, 256, 64, 10
# Padded (lane/MXU friendly) sizes used inside the kernel.
IN_PAD, H1_PAD, H2_PAD, OUT_PAD = 896, 256, 128, 128
TILE_B = 128  # batch rows per grid step (fills the MXU's systolic rows)


def mlp_kernel(x_ref, w1_ref, b1_ref, w2_ref, b2_ref, w3_ref, b3_ref, o_ref):
    # x_ref: (TILE_B, IN_PAD) bf16; weights bf16; biases f32; output f32.
    x = x_ref[...]
    h1 = jnp.dot(x, w1_ref[...], preferred_element_type=jnp.float32)
    h1 = jnp.maximum(h1 + b1_ref[...], 0.0)            # f32 epilogue
    h2 = jnp.dot(h1.astype(jnp.bfloat16), w2_ref[...],
                 preferred_element_type=jnp.float32)
    h2 = jnp.maximum(h2 + b2_ref[...], 0.0)             # f32 epilogue
    out = jnp.dot(h2.astype(jnp.bfloat16), w3_ref[...],
                  preferred_element_type=jnp.float32)
    o_ref[...] = out + b3_ref[...]                       # lane-dense (128-wide) store


def _pad_to(a, shape):
    pads = [(0, t - s) for s, t in zip(a.shape, shape)]
    return jnp.pad(a, pads)


@functools.partial(jax.jit, static_argnames=("tile_b",))
def mlp_forward(x, w1, b1, w2, b2, w3, b3, *, tile_b=TILE_B):
    """x: (B, 784) f32. Weights stored as (in, out), biases as (1, out) f32."""
    B = x.shape[0]
    b_pad = pl.cdiv(B, tile_b) * tile_b

    # Wrapper-side padding / casting (all zero padding => exact same math on
    # the real rows/columns).
    x_p = _pad_to(x, (b_pad, IN_PAD)).astype(jnp.bfloat16)
    w1_p = _pad_to(w1, (IN_PAD, H1_PAD)).astype(jnp.bfloat16)
    b1_p = _pad_to(b1, (1, H1_PAD)).astype(jnp.float32)
    w2_p = _pad_to(w2, (H1_PAD, H2_PAD)).astype(jnp.bfloat16)
    b2_p = _pad_to(b2, (1, H2_PAD)).astype(jnp.float32)
    w3_p = _pad_to(w3, (H2_PAD, OUT_PAD)).astype(jnp.bfloat16)
    b3_p = _pad_to(b3, (1, OUT_PAD)).astype(jnp.float32)

    const = lambda shape: pl.BlockSpec(shape, lambda i: tuple(0 for _ in shape))

    out_padded = pl.pallas_call(
        mlp_kernel,
        out_shape=jax.ShapeDtypeStruct((b_pad, OUT_PAD), jnp.float32),
        grid_spec=pltpu.PrefetchScalarGridSpec(
            num_scalar_prefetch=0,
            grid=(b_pad // tile_b,),
            in_specs=[
                pl.BlockSpec((tile_b, IN_PAD), lambda i: (i, 0)),  # x: tiled over batch
                const((IN_PAD, H1_PAD)),                           # weights/biases stay resident
                const((1, H1_PAD)),
                const((H1_PAD, H2_PAD)),
                const((1, H2_PAD)),
                const((H2_PAD, OUT_PAD)),
                const((1, OUT_PAD)),
            ],
            out_specs=pl.BlockSpec((tile_b, OUT_PAD), lambda i: (i, 0)),
        ),
        compiler_params=pltpu.CompilerParams(
            dimension_semantics=("parallel",),
        ),
    )(x_p, w1_p, b1_p, w2_p, b2_p, w3_p, b3_p)

    return out_padded[:B, :OUT_F]


def init_params(key):
    # Deterministic init mimicking torch.nn.Linear default:
    # U(-1/sqrt(fan_in), 1/sqrt(fan_in)); weights stored as (in, out) so the
    # forward is x @ W + b (== torch's x @ W.T + b with W=(out,in)).
    def linear(k, fan_in, fan_out):
        kw, kb = jax.random.split(k)
        bound = 1.0 / (fan_in ** 0.5)
        w = jax.random.uniform(kw, (fan_in, fan_out), jnp.float32, -bound, bound)
        b = jax.random.uniform(kb, (1, fan_out), jnp.float32, -bound, bound)
        return w, b

    k1, k2, k3 = jax.random.split(key, 3)
    w1, b1 = linear(k1, IN_F, H1_F)
    w2, b2 = linear(k2, H1_F, H2_F)
    w3, b3 = linear(k3, H2_F, OUT_F)
    return w1, b1, w2, b2, w3, b3


def reference_forward_f32(x, w1, b1, w2, b2, w3, b3):
    h1 = jnp.maximum(x @ w1 + b1, 0.0)
    h2 = jnp.maximum(h1 @ w2 + b2, 0.0)
    return h2 @ w3 + b3


def reference_forward_bf16(x, w1, b1, w2, b2, w3, b3):
    # Same bf16-operand / f32-accumulate semantics as the kernel.
    bf = jnp.bfloat16
    dot = lambda a, b: jnp.dot(a.astype(bf), b.astype(bf),
                               preferred_element_type=jnp.float32)
    h1 = jnp.maximum(dot(x, w1) + b1, 0.0)
    h2 = jnp.maximum(dot(h1, w2) + b2, 0.0)
    return dot(h2, w3) + b3


if __name__ == "__main__":
    key = jax.random.PRNGKey(0)
    kx, kp = jax.random.split(key)
    B = 8
    x = jax.random.normal(kx, (B, IN_F), dtype=jnp.float32)
    params = init_params(kp)

    out = mlp_forward(x, *params)
    out = jax.block_until_ready(out)
    assert out.shape == (B, OUT_F)

    # Tight check against a reference with identical bf16/f32 semantics.
    ref_bf16 = reference_forward_bf16(x, *params)
    assert jnp.allclose(out, ref_bf16, atol=2e-3, rtol=2e-3), "mismatch vs bf16 ref"

    # Loose check against the full-f32 torch-equivalent forward (bf16 rounding).
    ref_f32 = reference_forward_f32(x, *params)
    assert jnp.allclose(out, ref_f32, atol=5e-2, rtol=5e-2), "mismatch vs f32 ref"

    print("KERNEL_OK")
</pallas_src>

<mosaic_0001>
module attributes {stable_mosaic.version = 11 : i64} {
  func.func @mlp_kernel(%arg0: i32, %arg1: memref<128x896xbf16, #tpu.memory_space<vmem>>, %arg2: memref<896x256xbf16, #tpu.memory_space<vmem>>, %arg3: memref<1x256xf32, #tpu.memory_space<vmem>>, %arg4: memref<256x128xbf16, #tpu.memory_space<vmem>>, %arg5: memref<1x128xf32, #tpu.memory_space<vmem>>, %arg6: memref<128x128xbf16, #tpu.memory_space<vmem>>, %arg7: memref<1x128xf32, #tpu.memory_space<vmem>>, %arg8: memref<128x128xf32, #tpu.memory_space<vmem>>) attributes {dimension_semantics = [#tpu.dimension_semantics<parallel>], iteration_bounds = array<i64: 1>, scalar_prefetch = 0 : i64, scratch_operands = 0 : i64, tpu.core_type = #tpu.core_type<tc>, window_params = [{transform_indices = @transform_0, window_bounds = array<i64: 128, 896>}, {pipeline_mode = #tpu.pipeline_mode<synchronous>, transform_indices = @transform_1, window_bounds = array<i64: 896, 256>}, {pipeline_mode = #tpu.pipeline_mode<synchronous>, transform_indices = @transform_2, window_bounds = array<i64: 1, 256>}, {pipeline_mode = #tpu.pipeline_mode<synchronous>, transform_indices = @transform_3, window_bounds = array<i64: 256, 128>}, {pipeline_mode = #tpu.pipeline_mode<synchronous>, transform_indices = @transform_4, window_bounds = array<i64: 1, 128>}, {pipeline_mode = #tpu.pipeline_mode<synchronous>, transform_indices = @transform_5, window_bounds = array<i64: 128, 128>}, {pipeline_mode = #tpu.pipeline_mode<synchronous>, transform_indices = @transform_6, window_bounds = array<i64: 1, 128>}, {transform_indices = @transform_7, window_bounds = array<i64: 128, 128>}]} {
    %c0 = arith.constant 0 : index
    %c0_0 = arith.constant 0 : index
    %0 = vector.load %arg1[%c0, %c0_0] : memref<128x896xbf16, #tpu.memory_space<vmem>>, vector<128x896xbf16>
    %c0_1 = arith.constant 0 : index
    %c0_2 = arith.constant 0 : index
    %1 = vector.load %arg2[%c0_1, %c0_2] : memref<896x256xbf16, #tpu.memory_space<vmem>>, vector<896x256xbf16>
    %cst = arith.constant dense<0.000000e+00> : vector<128x256xf32>
    %2 = tpu.matmul %0, %1, %cst {dimension_numbers = #tpu.dot_dimension_numbers<[1], [0], [0], [1], [0, 0, 1, 1], [], []>} : vector<128x896xbf16>, vector<896x256xbf16>, vector<128x256xf32> -> vector<128x256xf32>
    %c0_3 = arith.constant 0 : index
    %c0_4 = arith.constant 0 : index
    %3 = vector.load %arg3[%c0_3, %c0_4] : memref<1x256xf32, #tpu.memory_space<vmem>>, vector<1x256xf32>
    %4 = vector.broadcast %3 : vector<1x256xf32> to vector<128x256xf32>
    %5 = arith.addf %2, %4 : vector<128x256xf32>
    %cst_5 = arith.constant 0.000000e+00 : f32
    %6 = vector.broadcast %cst_5 : f32 to vector<128x256xf32>
    %7 = arith.maximumf %5, %6 : vector<128x256xf32>
    %8 = arith.truncf %7 : vector<128x256xf32> to vector<128x256xbf16>
    %c0_6 = arith.constant 0 : index
    %c0_7 = arith.constant 0 : index
    %9 = vector.load %arg4[%c0_6, %c0_7] : memref<256x128xbf16, #tpu.memory_space<vmem>>, vector<256x128xbf16>
    %cst_8 = arith.constant dense<0.000000e+00> : vector<128x128xf32>
    %10 = tpu.matmul %8, %9, %cst_8 {dimension_numbers = #tpu.dot_dimension_numbers<[1], [0], [0], [1], [0, 0, 1, 1], [], []>} : vector<128x256xbf16>, vector<256x128xbf16>, vector<128x128xf32> -> vector<128x128xf32>
    %c0_9 = arith.constant 0 : index
    %c0_10 = arith.constant 0 : index
    %11 = vector.load %arg5[%c0_9, %c0_10] : memref<1x128xf32, #tpu.memory_space<vmem>>, vector<1x128xf32>
    %12 = vector.broadcast %11 : vector<1x128xf32> to vector<128x128xf32>
    %13 = arith.addf %10, %12 : vector<128x128xf32>
    %cst_11 = arith.constant 0.000000e+00 : f32
    %14 = vector.broadcast %cst_11 : f32 to vector<128x128xf32>
    %15 = arith.maximumf %13, %14 : vector<128x128xf32>
    %16 = arith.truncf %15 : vector<128x128xf32> to vector<128x128xbf16>
    %c0_12 = arith.constant 0 : index
    %c0_13 = arith.constant 0 : index
    %17 = vector.load %arg6[%c0_12, %c0_13] : memref<128x128xbf16, #tpu.memory_space<vmem>>, vector<128x128xbf16>
    %cst_14 = arith.constant dense<0.000000e+00> : vector<128x128xf32>
    %18 = tpu.matmul %16, %17, %cst_14 {dimension_numbers = #tpu.dot_dimension_numbers<[1], [0], [0], [1], [0, 0, 1, 1], [], []>} : vector<128x128xbf16>, vector<128x128xbf16>, vector<128x128xf32> -> vector<128x128xf32>
    %c0_15 = arith.constant 0 : index
    %c0_16 = arith.constant 0 : index
    %19 = vector.load %arg7[%c0_15, %c0_16] : memref<1x128xf32, #tpu.memory_space<vmem>>, vector<1x128xf32>
    %20 = vector.broadcast %19 : vector<1x128xf32> to vector<128x128xf32>
    %21 = arith.addf %18, %20 : vector<128x128xf32>
    %c0_17 = arith.constant 0 : index
    %c0_18 = arith.constant 0 : index
    %22 = vector.load %arg8[%c0_17, %c0_18] : memref<128x128xf32, #tpu.memory_space<vmem>>, vector<128x128xf32>
    tpu.vector_store %arg8[%c0_17, %c0_18], %21 {strides = array<i32>} : memref<128x128xf32, #tpu.memory_space<vmem>>, vector<128x128xf32>,
    return
  }
  func.func @transform_0(%arg0: i32) -> (i32, i32) {
    %c0_i32 = arith.constant 0 : i32
    %c0_i32_0 = arith.constant 0 : i32
    return %arg0, %c0_i32 : i32, i32
  }
  func.func @transform_1(%arg0: i32) -> (i32, i32) {
    %c0_i32 = arith.constant 0 : i32
    %c0_i32_0 = arith.constant 0 : i32
    %c0_i32_1 = arith.constant 0 : i32
    return %c0_i32, %c0_i32_0 : i32, i32
  }
  func.func @transform_2(%arg0: i32) -> (i32, i32) {
    %c0_i32 = arith.constant 0 : i32
    %c0_i32_0 = arith.constant 0 : i32
    %c0_i32_1 = arith.constant 0 : i32
    return %c0_i32, %c0_i32_0 : i32, i32
  }
  func.func @transform_3(%arg0: i32) -> (i32, i32) {
    %c0_i32 = arith.constant 0 : i32
    %c0_i32_0 = arith.constant 0 : i32
    %c0_i32_1 = arith.constant 0 : i32
    return %c0_i32, %c0_i32_0 : i32, i32
  }
  func.func @transform_4(%arg0: i32) -> (i32, i32) {
    %c0_i32 = arith.constant 0 : i32
    %c0_i32_0 = arith.constant 0 : i32
    %c0_i32_1 = arith.constant 0 : i32
    return %c0_i32, %c0_i32_0 : i32, i32
  }
  func.func @transform_5(%arg0: i32) -> (i32, i32) {
    %c0_i32 = arith.constant 0 : i32
    %c0_i32_0 = arith.constant 0 : i32
    %c0_i32_1 = arith.constant 0 : i32
    return %c0_i32, %c0_i32_0 : i32, i32
  }
  func.func @transform_6(%arg0: i32) -> (i32, i32) {
    %c0_i32 = arith.constant 0 : i32
    %c0_i32_0 = arith.constant 0 : i32
    %c0_i32_1 = arith.constant 0 : i32
    return %c0_i32, %c0_i32_0 : i32, i32
  }
  func.func @transform_7(%arg0: i32) -> (i32, i32) {
    %c0_i32 = arith.constant 0 : i32
    %c0_i32_0 = arith.constant 0 : i32
    return %arg0, %c0_i32 : i32, i32
  }
}

</mosaic_0001>

<llo_original>
// kernel: mlp_forward.1
$region0: #{mlp_forward.1}
  #allocation0 [shape = 'u32[]', space=smem, size = 0x4, offset = 0x4, fixed_abs, tag = 'smem constant byte address 0x4 - core index']
  #allocation1 [shape = 'u32[144,128]{1,0:T(1,128)}', space=vmem, size = 0x12000, scoped, tag = 'internal scratch']
  %s0 = inlined_call_operand.vmem [shape: bf16[128,896], index: 0, kind: input, shape index: {}]
  %s1 = inlined_call_operand.vmem [shape: bf16[896,256], index: 1, kind: input, shape index: {}]
  %s2 = inlined_call_operand.vmem [shape: f32[1,256], index: 2, kind: input, shape index: {}]
  %s3 = inlined_call_operand.vmem [shape: bf16[256,128], index: 3, kind: input, shape index: {}]
  %s4 = inlined_call_operand.vmem [shape: f32[1,128], index: 4, kind: input, shape index: {}]
  %s5 = inlined_call_operand.vmem [shape: bf16[128,128], index: 5, kind: input, shape index: {}]
  %s6 = inlined_call_operand.vmem [shape: f32[1,128], index: 6, kind: input, shape index: {}]
  %s7 = inlined_call_operand.vmem [shape: f32[128,128], index: 7, kind: output, shape index: {}]
  %s8 = sld [smem:[#allocation0]]
  $region38: #{mlp_forward.1} parent=0
    _
  %s10 = ssub.s32 1, %s8
  %s11 = scalar_select 0, %s10, %s8
  // Predicated region
  $region2: #{mlp_forward.1} parent=0 // pred_check
    _
  $region3: #{mlp_forward.1} parent=0 // pred_check_branch
    %13 = sbr.rel (0) target = $region5
  $region4: #{mlp_forward.1} parent=0 // pred_region
    _
  $region5: #{mlp_forward.1} parent=0 // pred_fallthru
    _
  // Predicated region
  $region6: #{mlp_forward.1} parent=0 // pred_check
    _
  $region7: #{mlp_forward.1} parent=0 // pred_check_branch
    %15 = sbr.rel (0) target = $region9
  $region8: #{mlp_forward.1} parent=0 // pred_region
    _
  $region9: #{mlp_forward.1} parent=0 // pred_fallthru
    _
  // Predicated region
  $region10: #{mlp_forward.1} parent=0 // pred_check
    _
  $region11: #{mlp_forward.1} parent=0 // pred_check_branch
    %17 = sbr.rel (0) target = $region13
  $region12: #{mlp_forward.1} parent=0 // pred_region
    _
  $region13: #{mlp_forward.1} parent=0 // pred_fallthru
    _
  // Predicated region
  $region14: #{mlp_forward.1} parent=0 // pred_check
    _
  $region15: #{mlp_forward.1} parent=0 // pred_check_branch
    %19 = sbr.rel (0) target = $region17
  $region16: #{mlp_forward.1} parent=0 // pred_region
    _
  $region17: #{mlp_forward.1} parent=0 // pred_fallthru
    _
  // Predicated region
  $region18: #{mlp_forward.1} parent=0 // pred_check
    _
  $region19: #{mlp_forward.1} parent=0 // pred_check_branch
    %21 = sbr.rel (0) target = $region21
  $region20: #{mlp_forward.1} parent=0 // pred_region
    _
  $region21: #{mlp_forward.1} parent=0 // pred_fallthru
    _
  // Predicated region
  $region22: #{mlp_forward.1} parent=0 // pred_check
    _
  $region23: #{mlp_forward.1} parent=0 // pred_check_branch
    %23 = sbr.rel (0) target = $region25
  $region24: #{mlp_forward.1} parent=0 // pred_region
    _
  $region25: #{mlp_forward.1} parent=0 // pred_fallthru
    _
  // Predicated region
  $region26: #{mlp_forward.1} parent=0 // pred_check
    _
  $region27: #{mlp_forward.1} parent=0 // pred_check_branch
    %25 = sbr.rel (0) target = $region29
  $region28: #{mlp_forward.1} parent=0 // pred_region
    _
  $region29: #{mlp_forward.1} parent=0 // pred_fallthru
    _
  %v27 = vld [vmem:[%s0] sm:$0xff]
  %v28 = vld [vmem:[%s0 + $0x8] sm:$0xff]
  %v29 = vld [vmem:[%s0 + $0x10] sm:$0xff]
  %v30 = vld [vmem:[%s0 + $0x18] sm:$0xf]
  %v31 = vld [vmem:[%s0 + $0x1c] sm:$0xff]
  %v32 = vld [vmem:[%s0 + $0x24] sm:$0xff]
  %v33 = vld [vmem:[%s0 + $0x2c] sm:$0xff]
  %v34 = vld [vmem:[%s0 + $0x34] sm:$0xf]
  %v35 = vld [vmem:[%s0 + $0x38] sm:$0xff]
  %v36 = vld [vmem:[%s0 + $0x40] sm:$0xff]
  %v37 = vld [vmem:[%s0 + $0x48] sm:$0xff]
  %v38 = vld [vmem:[%s0 + $0x50] sm:$0xf]
  %v39 = vld [vmem:[%s0 + $0x54] sm:$0xff]
  %v40 = vld [vmem:[%s0 + $0x5c] sm:$0xff]
  %v41 = vld [vmem:[%s0 + $0x64] sm:$0xff]
  %v42 = vld [vmem:[%s0 + $0x6c] sm:$0xf]
  %v43 = vld [vmem:[%s0 + $0x70] sm:$0xff]
  %v44 = vld [vmem:[%s0 + $0x78] sm:$0xff]
  %v45 = vld [vmem:[%s0 + $0x80] sm:$0xff]
  %v46 = vld [vmem:[%s0 + $0x88] sm:$0xf]
  %v47 = vld [vmem:[%s0 + $0x8c] sm:$0xff]
  %v48 = vld [vmem:[%s0 + $0x94] sm:$0xff]
  %v49 = vld [vmem:[%s0 + $0x9c] sm:$0xff]
  %v50 = vld [vmem:[%s0 + $0xa4] sm:$0xf]
  %v51 = vld [vmem:[%s0 + $0xa8] sm:$0xff]
  %v52 = vld [vmem:[%s0 + $0xb0] sm:$0xff]
  %v53 = vld [vmem:[%s0 + $0xb8] sm:$0xff]
  %v54 = vld [vmem:[%s0 + $0xc0] sm:$0xf]
  %v55 = vld [vmem:[%s0 + $0xc4] sm:$0xff]
  %v56 = vld [vmem:[%s0 + $0xcc] sm:$0xff]
  %v57 = vld [vmem:[%s0 + $0xd4] sm:$0xff]
  %v58 = vld [vmem:[%s0 + $0xdc] sm:$0xf]
  %v59 = vld [vmem:[%s0 + $0xe0] sm:$0xff]
  %v60 = vld [vmem:[%s0 + $0xe8] sm:$0xff]
  %v61 = vld [vmem:[%s0 + $0xf0] sm:$0xff]
  %v62 = vld [vmem:[%s0 + $0xf8] sm:$0xf]
  %v63 = vld [vmem:[%s0 + $0xfc] sm:$0xff]
  %v64 = vld [vmem:[%s0 + $0x104] sm:$0xff]
  %v65 = vld [vmem:[%s0 + $0x10c] sm:$0xff]
  %v66 = vld [vmem:[%s0 + $0x114] sm:$0xf]
  %v67 = vld [vmem:[%s0 + $0x118] sm:$0xff]
  %v68 = vld [vmem:[%s0 + $0x120] sm:$0xff]
  %v69 = vld [vmem:[%s0 + $0x128] sm:$0xff]
  %v70 = vld [vmem:[%s0 + $0x130] sm:$0xf]
  %v71 = vld [vmem:[%s0 + $0x134] sm:$0xff]
  %v72 = vld [vmem:[%s0 + $0x13c] sm:$0xff]
  %v73 = vld [vmem:[%s0 + $0x144] sm:$0xff]
  %v74 = vld [vmem:[%s0 + $0x14c] sm:$0xf]
  %v75 = vld [vmem:[%s0 + $0x150] sm:$0xff]
  %v76 = vld [vmem:[%s0 + $0x158] sm:$0xff]
  %v77 = vld [vmem:[%s0 + $0x160] sm:$0xff]
  %v78 = vld [vmem:[%s0 + $0x168] sm:$0xf]
  %v79 = vld [vmem:[%s0 + $0x16c] sm:$0xff]
  %v80 = vld [vmem:[%s0 + $0x174] sm:$0xff]
  %v81 = vld [vmem:[%s0 + $0x17c] sm:$0xff]
  %v82 = vld [vmem:[%s0 + $0x184] sm:$0xf]
  %v83 = vld [vmem:[%s0 + $0x188] sm:$0xff]
  %v84 = vld [vmem:[%s0 + $0x190] sm:$0xff]
  %v85 = vld [vmem:[%s0 + $0x198] sm:$0xff]
  %v86 = vld [vmem:[%s0 + $0x1a0] sm:$0xf]
  %v87 = vld [vmem:[%s0 + $0x1a4] sm:$0xff]
  %v88 = vld [vmem:[%s0 + $0x1ac] sm:$0xff]
  %v89 = vld [vmem:[%s0 + $0x1b4] sm:$0xff]
  %v90 = vld [vmem:[%s0 + $0x1bc] sm:$0xf]
  %v91 = vld [vmem:[%s1] sm:$0xff]
  %v92 = vld [vmem:[%s1 + $0x8] sm:$0xff]
  %v93 = vld [vmem:[%s1 + $0x10] sm:$0xff]
  %v94 = vld [vmem:[%s1 + $0x18] sm:$0xff]
  %v95 = vld [vmem:[%s1 + $0x20] sm:$0xff]
  %v96 = vld [vmem:[%s1 + $0x28] sm:$0xff]
  %v97 = vld [vmem:[%s1 + $0x30] sm:$0xff]
  %v98 = vld [vmem:[%s1 + $0x38] sm:$0xff]
  %v99 = vld [vmem:[%s1 + $0x40] sm:$0xff]
  %v100 = vld [vmem:[%s1 + $0x48] sm:$0xff]
  %v101 = vld [vmem:[%s1 + $0x50] sm:$0xff]
  %v102 = vld [vmem:[%s1 + $0x58] sm:$0xff]
  %v103 = vld [vmem:[%s1 + $0x60] sm:$0xff]
  %v104 = vld [vmem:[%s1 + $0x68] sm:$0xff]
  %v105 = vld [vmem:[%s1 + $0x70] sm:$0xff]
  %v106 = vld [vmem:[%s1 + $0x78] sm:$0xff]
  %v107 = vld [vmem:[%s1 + $0x80] sm:$0xff]
  %v108 = vld [vmem:[%s1 + $0x88] sm:$0xff]
  %v109 = vld [vmem:[%s1 + $0x90] sm:$0xff]
  %v110 = vld [vmem:[%s1 + $0x98] sm:$0xff]
  %v111 = vld [vmem:[%s1 + $0xa0] sm:$0xff]
  %v112 = vld [vmem:[%s1 + $0xa8] sm:$0xff]
  %v113 = vld [vmem:[%s1 + $0xb0] sm:$0xff]
  %v114 = vld [vmem:[%s1 + $0xb8] sm:$0xff]
  %v115 = vld [vmem:[%s1 + $0xc0] sm:$0xff]
  %v116 = vld [vmem:[%s1 + $0xc8] sm:$0xff]
  %v117 = vld [vmem:[%s1 + $0xd0] sm:$0xff]
  %v118 = vld [vmem:[%s1 + $0xd8] sm:$0xff]
  %v119 = vld [vmem:[%s1 + $0xe0] sm:$0xff]
  %v120 = vld [vmem:[%s1 + $0xe8] sm:$0xff]
  %v121 = vld [vmem:[%s1 + $0xf0] sm:$0xff]
  %v122 = vld [vmem:[%s1 + $0xf8] sm:$0xff]
  %v123 = vld [vmem:[%s1 + $0x100] sm:$0xff]
  %v124 = vld [vmem:[%s1 + $0x108] sm:$0xff]
  %v125 = vld [vmem:[%s1 + $0x110] sm:$0xff]
  %v126 = vld [vmem:[%s1 + $0x118] sm:$0xff]
  %v127 = vld [vmem:[%s1 + $0x120] sm:$0xff]
  %v128 = vld [vmem:[%s1 + $0x128] sm:$0xff]
  %v129 = vld [vmem:[%s1 + $0x130] sm:$0xff]
  %v130 = vld [vmem:[%s1 + $0x138] sm:$0xff]
  %v131 = vld [vmem:[%s1 + $0x140] sm:$0xff]
  %v132 = vld [vmem:[%s1 + $0x148] sm:$0xff]
  %v133 = vld [vmem:[%s1 + $0x150] sm:$0xff]
  %v134 = vld [vmem:[%s1 + $0x158] sm:$0xff]
  %v135 = vld [vmem:[%s1 + $0x160] sm:$0xff]
  %v136 = vld [vmem:[%s1 + $0x168] sm:$0xff]
  %v137 = vld [vmem:[%s1 + $0x170] sm:$0xff]
  %v138 = vld [vmem:[%s1 + $0x178] sm:$0xff]
  %v139 = vld [vmem:[%s1 + $0x180] sm:$0xff]
  %v140 = vld [vmem:[%s1 + $0x188] sm:$0xff]
  %v141 = vld [vmem:[%s1 + $0x190] sm:$0xff]
  %v142 = vld [vmem:[%s1 + $0x198] sm:$0xff]
  %v143 = vld [vmem:[%s1 + $0x1a0] sm:$0xff]
  %v144 = vld [vmem:[%s1 + $0x1a8] sm:$0xff]
  %v145 = vld [vmem:[%s1 + $0x1b0] sm:$0xff]
  %v146 = vld [vmem:[%s1 + $0x1b8] sm:$0xff]
  %v147 = vld [vmem:[%s1 + $0x1c0] sm:$0xff]
  %v148 = vld [vmem:[%s1 + $0x1c8] sm:$0xff]
  %v149 = vld [vmem:[%s1 + $0x1d0] sm:$0xff]
  %v150 = vld [vmem:[%s1 + $0x1d8] sm:$0xff]
  %v151 = vld [vmem:[%s1 + $0x1e0] sm:$0xff]
  %v152 = vld [vmem:[%s1 + $0x1e8] sm:$0xff]
  %v153 = vld [vmem:[%s1 + $0x1f0] sm:$0xff]
  %v154 = vld [vmem:[%s1 + $0x1f8] sm:$0xff]
  %v155 = vld [vmem:[%s1 + $0x200] sm:$0xff]
  %v156 = vld [vmem:[%s1 + $0x208] sm:$0xff]
  %v157 = vld [vmem:[%s1 + $0x210] sm:$0xff]
  %v158 = vld [vmem:[%s1 + $0x218] sm:$0xff]
  %v159 = vld [vmem:[%s1 + $0x220] sm:$0xff]
  %v160 = vld [vmem:[%s1 + $0x228] sm:$0xff]
  %v161 = vld [vmem:[%s1 + $0x230] sm:$0xff]
  %v162 = vld [vmem:[%s1 + $0x238] sm:$0xff]
  %v163 = vld [vmem:[%s1 + $0x240] sm:$0xff]
  %v164 = vld [vmem:[%s1 + $0x248] sm:$0xff]
  %v165 = vld [vmem:[%s1 + $0x250] sm:$0xff]
  %v166 = vld [vmem:[%s1 + $0x258] sm:$0xff]
  %v167 = vld [vmem:[%s1 + $0x260] sm:$0xff]
  %v168 = vld [vmem:[%s1 + $0x268] sm:$0xff]
  %v169 = vld [vmem:[%s1 + $0x270] sm:$0xff]
  %v170 = vld [vmem:[%s1 + $0x278] sm:$0xff]
  %v171 = vld [vmem:[%s1 + $0x280] sm:$0xff]
  %v172 = vld [vmem:[%s1 + $0x288] sm:$0xff]
  %v173 = vld [vmem:[%s1 + $0x290] sm:$0xff]
  %v174 = vld [vmem:[%s1 + $0x298] sm:$0xff]
  %v175 = vld [vmem:[%s1 + $0x2a0] sm:$0xff]
  %v176 = vld [vmem:[%s1 + $0x2a8] sm:$0xff]
  %v177 = vld [vmem:[%s1 + $0x2b0] sm:$0xff]
  %v178 = vld [vmem:[%s1 + $0x2b8] sm:$0xff]
  %v179 = vld [vmem:[%s1 + $0x2c0] sm:$0xff]
  %v180 = vld [vmem:[%s1 + $0x2c8] sm:$0xff]
  %v181 = vld [vmem:[%s1 + $0x2d0] sm:$0xff]
  %v182 = vld [vmem:[%s1 + $0x2d8] sm:$0xff]
  %v183 = vld [vmem:[%s1 + $0x2e0] sm:$0xff]
  %v184 = vld [vmem:[%s1 + $0x2e8] sm:$0xff]
  %v185 = vld [vmem:[%s1 + $0x2f0] sm:$0xff]
  %v186 = vld [vmem:[%s1 + $0x2f8] sm:$0xff]
  %v187 = vld [vmem:[%s1 + $0x300] sm:$0xff]
  %v188 = vld [vmem:[%s1 + $0x308] sm:$0xff]
  %v189 = vld [vmem:[%s1 + $0x310] sm:$0xff]
  %v190 = vld [vmem:[%s1 + $0x318] sm:$0xff]
  %v191 = vld [vmem:[%s1 + $0x320] sm:$0xff]
  %v192 = vld [vmem:[%s1 + $0x328] sm:$0xff]
  %v193 = vld [vmem:[%s1 + $0x330] sm:$0xff]
  %v194 = vld [vmem:[%s1 + $0x338] sm:$0xff]
  %v195 = vld [vmem:[%s1 + $0x340] sm:$0xff]
  %v196 = vld [vmem:[%s1 + $0x348] sm:$0xff]
  %v197 = vld [vmem:[%s1 + $0x350] sm:$0xff]
  %v198 = vld [vmem:[%s1 + $0x358] sm:$0xff]
  %v199 = vld [vmem:[%s1 + $0x360] sm:$0xff]
  %v200 = vld [vmem:[%s1 + $0x368] sm:$0xff]
  %v201 = vld [vmem:[%s1 + $0x370] sm:$0xff]
  %v202 = vld [vmem:[%s1 + $0x378] sm:$0xff]
  %v203 = vld [vmem:[%s2] sm:$0x3]
  %v205 = vlaneseq
  %v206 = vshrl.u32 %v205, 7
  %v207 = vsub.s32 0, %v206
  %v208 = vrot.slane %v203, %v207
  %v209 = vlaneseq
  %v210 = vshrl.u32 %v209, 7
  %v211 = vsub.s32 1, %v210
  %v212 = vrot.slane %v203, %v211
  %v279 = vunpack.c.l.b16 %v27
  %v280 = vunpack.c.h.b16 %v27
  %v281 = vunpack.c.l.b16 %v28
  %v282 = vunpack.c.h.b16 %v28
  %v283 = vunpack.c.l.b16 %v29
  %v284 = vunpack.c.h.b16 %v29
  %v285 = vunpack.c.l.b16 %v30
  %v286 = vunpack.c.l.b16 %v31
  %v287 = vunpack.c.h.b16 %v31
  %v288 = vunpack.c.l.b16 %v32
  %v289 = vunpack.c.h.b16 %v32
  %v290 = vunpack.c.l.b16 %v33
  %v291 = vunpack.c.h.b16 %v33
  %v292 = vunpack.c.l.b16 %v34
  %v293 = vunpack.c.l.b16 %v35
  %v294 = vunpack.c.h.b16 %v35
  %v295 = vunpack.c.l.b16 %v36
  %v296 = vunpack.c.h.b16 %v36
  %v297 = vunpack.c.l.b16 %v37
  %v298 = vunpack.c.h.b16 %v37
  %v299 = vunpack.c.l.b16 %v38
  %v300 = vunpack.c.l.b16 %v39
  %v301 = vunpack.c.h.b16 %v39
  %v302 = vunpack.c.l.b16 %v40
  %v303 = vunpack.c.h.b16 %v40
  %v304 = vunpack.c.l.b16 %v41
  %v305 = vunpack.c.h.b16 %v41
  %v306 = vunpack.c.l.b16 %v42
  %v307 = vunpack.c.l.b16 %v43
  %v308 = vunpack.c.h.b16 %v43
  %v309 = vunpack.c.l.b16 %v44
  %v310 = vunpack.c.h.b16 %v44
  %v311 = vunpack.c.l.b16 %v45
  %v312 = vunpack.c.h.b16 %v45
  %v313 = vunpack.c.l.b16 %v46
  %v314 = vunpack.c.l.b16 %v47
  %v315 = vunpack.c.h.b16 %v47
  %v316 = vunpack.c.l.b16 %v48
  %v317 = vunpack.c.h.b16 %v48
  %v318 = vunpack.c.l.b16 %v49
  %v319 = vunpack.c.h.b16 %v49
  %v320 = vunpack.c.l.b16 %v50
  %v321 = vunpack.c.l.b16 %v51
  %v322 = vunpack.c.h.b16 %v51
  %v323 = vunpack.c.l.b16 %v52
  %v324 = vunpack.c.h.b16 %v52
  %v325 = vunpack.c.l.b16 %v53
  %v326 = vunpack.c.h.b16 %v53
  %v327 = vunpack.c.l.b16 %v54
  %v328 = vunpack.c.l.b16 %v55
  %v329 = vunpack.c.h.b16 %v55
  %v330 = vunpack.c.l.b16 %v56
  %v331 = vunpack.c.h.b16 %v56
  %v332 = vunpack.c.l.b16 %v57
  %v333 = vunpack.c.h.b16 %v57
  %v334 = vunpack.c.l.b16 %v58
  %v335 = vunpack.c.l.b16 %v59
  %v336 = vunpack.c.h.b16 %v59
  %v337 = vunpack.c.l.b16 %v60
  %v338 = vunpack.c.h.b16 %v60
  %v339 = vunpack.c.l.b16 %v61
  %v340 = vunpack.c.h.b16 %v61
  %v341 = vunpack.c.l.b16 %v62
  %v342 = vunpack.c.l.b16 %v63
  %v343 = vunpack.c.h.b16 %v63
  %v344 = vunpack.c.l.b16 %v64
  %v345 = vunpack.c.h.b16 %v64
  %v346 = vunpack.c.l.b16 %v65
  %v347 = vunpack.c.h.b16 %v65
  %v348 = vunpack.c.l.b16 %v66
  %v349 = vunpack.c.l.b16 %v67
  %v350 = vunpack.c.h.b16 %v67
  %v351 = vunpack.c.l.b16 %v68
  %v352 = vunpack.c.h.b16 %v68
  %v353 = vunpack.c.l.b16 %v69
  %v354 = vunpack.c.h.b16 %v69
  %v355 = vunpack.c.l.b16 %v70
  %v356 = vunpack.c.l.b16 %v71
  %v357 = vunpack.c.h.b16 %v71
  %v358 = vunpack.c.l.b16 %v72
  %v359 = vunpack.c.h.b16 %v72
  %v360 = vunpack.c.l.b16 %v73
  %v361 = vunpack.c.h.b16 %v73
  %v362 = vunpack.c.l.b16 %v74
  %v363 = vunpack.c.l.b16 %v75
  %v364 = vunpack.c.h.b16 %v75
  %v365 = vunpack.c.l.b16 %v76
  %v366 = vunpack.c.h.b16 %v76
  %v367 = vunpack.c.l.b16 %v77
  %v368 = vunpack.c.h.b16 %v77
  %v369 = vunpack.c.l.b16 %v78
  %v370 = vunpack.c.l.b16 %v79
  %v371 = vunpack.c.h.b16 %v79
  %v372 = vunpack.c.l.b16 %v80
  %v373 = vunpack.c.h.b16 %v80
  %v374 = vunpack.c.l.b16 %v81
  %v375 = vunpack.c.h.b16 %v81
  %v376 = vunpack.c.l.b16 %v82
  %v377 = vunpack.c.l.b16 %v83
  %v378 = vunpack.c.h.b16 %v83
  %v379 = vunpack.c.l.b16 %v84
  %v380 = vunpack.c.h.b16 %v84
  %v381 = vunpack.c.l.b16 %v85
  %v382 = vunpack.c.h.b16 %v85
  %v383 = vunpack.c.l.b16 %v86
  %v384 = vunpack.c.l.b16 %v87
  %v385 = vunpack.c.h.b16 %v87
  %v386 = vunpack.c.l.b16 %v88
  %v387 = vunpack.c.h.b16 %v88
  %v388 = vunpack.c.l.b16 %v89
  %v389 = vunpack.c.h.b16 %v89
  %v390 = vunpack.c.l.b16 %v90
  %v391 = vpack.c.b16 %v286, %v279
  %v392 = vpack.c.b16 %v287, %v280
  %v393 = vpack.c.b16 %v288, %v281
  %v394 = vpack.c.b16 %v289, %v282
  %v395 = vpack.c.b16 %v290, %v283
  %v396 = vpack.c.b16 %v291, %v284
  %v397 = vpack.c.b16 %v292, %v285
  %v398 = vpack.c.b16 %v300, %v293
  %v399 = vpack.c.b16 %v301, %v294
  %v400 = vpack.c.b16 %v302, %v295
  %v401 = vpack.c.b16 %v303, %v296
  %v402 = vpack.c.b16 %v304, %v297
  %v403 = vpack.c.b16 %v305, %v298
  %v404 = vpack.c.b16 %v306, %v299
  %v405 = vpack.c.b16 %v314, %v307
  %v406 = vpack.c.b16 %v315, %v308
  %v407 = vpack.c.b16 %v316, %v309
  %v408 = vpack.c.b16 %v317, %v310
  %v409 = vpack.c.b16 %v318, %v311
  %v410 = vpack.c.b16 %v319, %v312
  %v411 = vpack.c.b16 %v320, %v313
  %v412 = vpack.c.b16 %v328, %v321
  %v413 = vpack.c.b16 %v329, %v322
  %v414 = vpack.c.b16 %v330, %v323
  %v415 = vpack.c.b16 %v331, %v324
  %v416 = vpack.c.b16 %v332, %v325
  %v417 = vpack.c.b16 %v333, %v326
  %v418 = vpack.c.b16 %v334, %v327
  %v419 = vpack.c.b16 %v342, %v335
  %v420 = vpack.c.b16 %v343, %v336
  %v421 = vpack.c.b16 %v344, %v337
  %v422 = vpack.c.b16 %v345, %v338
  %v423 = vpack.c.b16 %v346, %v339
  %v424 = vpack.c.b16 %v347, %v340
  %v425 = vpack.c.b16 %v348, %v341
  %v426 = vpack.c.b16 %v356, %v349
  %v427 = vpack.c.b16 %v357, %v350
  %v428 = vpack.c.b16 %v358, %v351
  %v429 = vpack.c.b16 %v359, %v352
  %v430 = vpack.c.b16 %v360, %v353
  %v431 = vpack.c.b16 %v361, %v354
  %v432 = vpack.c.b16 %v362, %v355
  %v433 = vpack.c.b16 %v370, %v363
  %v434 = vpack.c.b16 %v371, %v364
  %v435 = vpack.c.b16 %v372, %v365
  %v436 = vpack.c.b16 %v373, %v366
  %v437 = vpack.c.b16 %v374, %v367
  %v438 = vpack.c.b16 %v375, %v368
  %v439 = vpack.c.b16 %v376, %v369
  %v440 = vpack.c.b16 %v384, %v377
  %v441 = vpack.c.b16 %v385, %v378
  %v442 = vpack.c.b16 %v386, %v379
  %v443 = vpack.c.b16 %v387, %v380
  %v444 = vpack.c.b16 %v388, %v381
  %v445 = vpack.c.b16 %v389, %v382
  %v446 = vpack.c.b16 %v390, %v383
  %v615 = vunpack.c.l.b16 %v91
  %v616 = vunpack.c.h.b16 %v91
  %v617 = vunpack.c.l.b16 %v92
  %v618 = vunpack.c.h.b16 %v92
  %v619 = vunpack.c.l.b16 %v93
  %v620 = vunpack.c.h.b16 %v93
  %v621 = vunpack.c.l.b16 %v94
  %v622 = vunpack.c.h.b16 %v94
  %v623 = vunpack.c.l.b16 %v95
  %v624 = vunpack.c.h.b16 %v95
  %v625 = vunpack.c.l.b16 %v96
  %v626 = vunpack.c.h.b16 %v96
  %v627 = vunpack.c.l.b16 %v97
  %v628 = vunpack.c.h.b16 %v97
  %v629 = vunpack.c.l.b16 %v98
  %v630 = vunpack.c.h.b16 %v98
  %v631 = vunpack.c.l.b16 %v99
  %v632 = vunpack.c.h.b16 %v99
  %v633 = vunpack.c.l.b16 %v100
  %v634 = vunpack.c.h.b16 %v100
  %v635 = vunpack.c.l.b16 %v101
  %v636 = vunpack.c.h.b16 %v101
  %v637 = vunpack.c.l.b16 %v102
  %v638 = vunpack.c.h.b16 %v102
  %v639 = vunpack.c.l.b16 %v103
  %v640 = vunpack.c.h.b16 %v103
  %v641 = vunpack.c.l.b16 %v104
  %v642 = vunpack.c.h.b16 %v104
  %v643 = vunpack.c.l.b16 %v105
  %v644 = vunpack.c.h.b16 %v105
  %v645 = vunpack.c.l.b16 %v106
  %v646 = vunpack.c.h.b16 %v106
  %v647 = vunpack.c.l.b16 %v107
  %v648 = vunpack.c.h.b16 %v107
  %v649 = vunpack.c.l.b16 %v108
  %v650 = vunpack.c.h.b16 %v108
  %v651 = vunpack.c.l.b16 %v109
  %v652 = vunpack.c.h.b16 %v109
  %v653 = vunpack.c.l.b16 %v110
  %v654 = vunpack.c.h.b16 %v110
  %v655 = vunpack.c.l.b16 %v111
  %v656 = vunpack.c.h.b16 %v111
  %v657 = vunpack.c.l.b16 %v112
  %v658 = vunpack.c.h.b16 %v112
  %v659 = vunpack.c.l.b16 %v113
  %v660 = vunpack.c.h.b16 %v113
  %v661 = vunpack.c.l.b16 %v114
  %v662 = vunpack.c.h.b16 %v114
  %v663 = vunpack.c.l.b16 %v115
  %v664 = vunpack.c.h.b16 %v115
  %v665 = vunpack.c.l.b16 %v116
  %v666 = vunpack.c.h.b16 %v116
  %v667 = vunpack.c.l.b16 %v117
  %v668 = vunpack.c.h.b16 %v117
  %v669 = vunpack.c.l.b16 %v118
  %v670 = vunpack.c.h.b16 %v118
  %v671 = vunpack.c.l.b16 %v119
  %v672 = vunpack.c.h.b16 %v119
  %v673 = vunpack.c.l.b16 %v120
  %v674 = vunpack.c.h.b16 %v120
  %v675 = vunpack.c.l.b16 %v121
  %v676 = vunpack.c.h.b16 %v121
  %v677 = vunpack.c.l.b16 %v122
  %v678 = vunpack.c.h.b16 %v122
  %v679 = vunpack.c.l.b16 %v123
  %v680 = vunpack.c.h.b16 %v123
  %v681 = vunpack.c.l.b16 %v124
  %v682 = vunpack.c.h.b16 %v124
  %v683 = vunpack.c.l.b16 %v125
  %v684 = vunpack.c.h.b16 %v125
  %v685 = vunpack.c.l.b16 %v126
  %v686 = vunpack.c.h.b16 %v126
  %v687 = vunpack.c.l.b16 %v127
  %v688 = vunpack.c.h.b16 %v127
  %v689 = vunpack.c.l.b16 %v128
  %v690 = vunpack.c.h.b16 %v128
  %v691 = vunpack.c.l.b16 %v129
  %v692 = vunpack.c.h.b16 %v129
  %v693 = vunpack.c.l.b16 %v130
  %v694 = vunpack.c.h.b16 %v130
  %v695 = vunpack.c.l.b16 %v131
  %v696 = vunpack.c.h.b16 %v131
  %v697 = vunpack.c.l.b16 %v132
  %v698 = vunpack.c.h.b16 %v132
  %v699 = vunpack.c.l.b16 %v133
  %v700 = vunpack.c.h.b16 %v133
  %v701 = vunpack.c.l.b16 %v134
  %v702 = vunpack.c.h.b16 %v134
  %v703 = vunpack.c.l.b16 %v135
  %v704 = vunpack.c.h.b16 %v135
  %v705 = vunpack.c.l.b16 %v136
  %v706 = vunpack.c.h.b16 %v136
  %v707 = vunpack.c.l.b16 %v137
  %v708 = vunpack.c.h.b16 %v137
  %v709 = vunpack.c.l.b16 %v138
  %v710 = vunpack.c.h.b16 %v138
  %v711 = vunpack.c.l.b16 %v139
  %v712 = vunpack.c.h.b16 %v139
  %v713 = vunpack.c.l.b16 %v140
  %v714 = vunpack.c.h.b16 %v140
  %v715 = vunpack.c.l.b16 %v141
  %v716 = vunpack.c.h.b16 %v141
  %v717 = vunpack.c.l.b16 %v142
  %v718 = vunpack.c.h.b16 %v142
  %v719 = vunpack.c.l.b16 %v143
  %v720 = vunpack.c.h.b16 %v143
  %v721 = vunpack.c.l.b16 %v144
  %v722 = vunpack.c.h.b16 %v144
  %v723 = vunpack.c.l.b16 %v145
  %v724 = vunpack.c.h.b16 %v145
  %v725 = vunpack.c.l.b16 %v146
  %v726 = vunpack.c.h.b16 %v146
  %v727 = vunpack.c.l.b16 %v147
  %v728 = vunpack.c.h.b16 %v147
  %v729 = vunpack.c.l.b16 %v148
  %v730 = vunpack.c.h.b16 %v148
  %v731 = vunpack.c.l.b16 %v149
  %v732 = vunpack.c.h.b16 %v149
  %v733 = vunpack.c.l.b16 %v150
  %v734 = vunpack.c.h.b16 %v150
  %v735 = vunpack.c.l.b16 %v151
  %v736 = vunpack.c.h.b16 %v151
  %v737 = vunpack.c.l.b16 %v152
  %v738 = vunpack.c.h.b16 %v152
  %v739 = vunpack.c.l.b16 %v153
  %v740 = vunpack.c.h.b16 %v153
  %v741 = vunpack.c.l.b16 %v154
  %v742 = vunpack.c.h.b16 %v154
  %v743 = vunpack.c.l.b16 %v155
  %v744 = vunpack.c.h.b16 %v155
  %v745 = vunpack.c.l.b16 %v156
  %v746 = vunpack.c.h.b16 %v156
  %v747 = vunpack.c.l.b16 %v157
  %v748 = vunpack.c.h.b16 %v157
  %v749 = vunpack.c.l.b16 %v158
  %v750 = vunpack.c.h.b16 %v158
  %v751 = vunpack.c.l.b16 %v159
  %v752 = vunpack.c.h.b16 %v159
  %v753 = vunpack.c.l.b16 %v160
  %v754 = vunpack.c.h.b16 %v160
  %v755 = vunpack.c.l.b16 %v161
  %v756 = vunpack.c.h.b16 %v161
  %v757 = vunpack.c.l.b16 %v162
  %v758 = vunpack.c.h.b16 %v162
  %v759 = vunpack.c.l.b16 %v163
  %v760 = vunpack.c.h.b16 %v163
  %v761 = vunpack.c.l.b16 %v164
  %v762 = vunpack.c.h.b16 %v164
  %v763 = vunpack.c.l.b16 %v165
  %v764 = vunpack.c.h.b16 %v165
  %v765 = vunpack.c.l.b16 %v166
  %v766 = vunpack.c.h.b16 %v166
  %v767 = vunpack.c.l.b16 %v167
  %v768 = vunpack.c.h.b16 %v167
  %v769 = vunpack.c.l.b16 %v168
  %v770 = vunpack.c.h.b16 %v168
  %v771 = vunpack.c.l.b16 %v169
  %v772 = vunpack.c.h.b16 %v169
  %v773 = vunpack.c.l.b16 %v170
  %v774 = vunpack.c.h.b16 %v170
  %v775 = vunpack.c.l.b16 %v171
  %v776 = vunpack.c.h.b16 %v171
  %v777 = vunpack.c.l.b16 %v172
  %v778 = vunpack.c.h.b16 %v172
  %v779 = vunpack.c.l.b16 %v173
  %v780 = vunpack.c.h.b16 %v173
  %v781 = vunpack.c.l.b16 %v174
  %v782 = vunpack.c.h.b16 %v174
  %v783 = vunpack.c.l.b16 %v175
  %v784 = vunpack.c.h.b16 %v175
  %v785 = vunpack.c.l.b16 %v176
  %v786 = vunpack.c.h.b16 %v176
  %v787 = vunpack.c.l.b16 %v177
  %v788 = vunpack.c.h.b16 %v177
  %v789 = vunpack.c.l.b16 %v178
  %v790 = vunpack.c.h.b16 %v178
  %v791 = vunpack.c.l.b16 %v179
  %v792 = vunpack.c.h.b16 %v179
  %v793 = vunpack.c.l.b16 %v180
  %v794 = vunpack.c.h.b16 %v180
  %v795 = vunpack.c.l.b16 %v181
  %v796 = vunpack.c.h.b16 %v181
  %v797 = vunpack.c.l.b16 %v182
  %v798 = vunpack.c.h.b16 %v182
  %v799 = vunpack.c.l.b16 %v183
  %v800 = vunpack.c.h.b16 %v183
  %v801 = vunpack.c.l.b16 %v184
  %v802 = vunpack.c.h.b16 %v184
  %v803 = vunpack.c.l.b16 %v185
  %v804 = vunpack.c.h.b16 %v185
  %v805 = vunpack.c.l.b16 %v186
  %v806 = vunpack.c.h.b16 %v186
  %v807 = vunpack.c.l.b16 %v187
  %v808 = vunpack.c.h.b16 %v187
  %v809 = vunpack.c.l.b16 %v188
  %v810 = vunpack.c.h.b16 %v188
  %v811 = vunpack.c.l.b16 %v189
  %v812 = vunpack.c.h.b16 %v189
  %v813 = vunpack.c.l.b16 %v190
  %v814 = vunpack.c.h.b16 %v190
  %v815 = vunpack.c.l.b16 %v191
  %v816 = vunpack.c.h.b16 %v191
  %v817 = vunpack.c.l.b16 %v192
  %v818 = vunpack.c.h.b16 %v192
  %v819 = vunpack.c.l.b16 %v193
  %v820 = vunpack.c.h.b16 %v193
  %v821 = vunpack.c.l.b16 %v194
  %v822 = vunpack.c.h.b16 %v194
  %v823 = vunpack.c.l.b16 %v195
  %v824 = vunpack.c.h.b16 %v195
  %v825 = vunpack.c.l.b16 %v196
  %v826 = vunpack.c.h.b16 %v196
  %v827 = vunpack.c.l.b16 %v197
  %v828 = vunpack.c.h.b16 %v197
  %v829 = vunpack.c.l.b16 %v198
  %v830 = vunpack.c.h.b16 %v198
  %v831 = vunpack.c.l.b16 %v199
  %v832 = vunpack.c.h.b16 %v199
  %v833 = vunpack.c.l.b16 %v200
  %v834 = vunpack.c.h.b16 %v200
  %v835 = vunpack.c.l.b16 %v201
  %v836 = vunpack.c.h.b16 %v201
  %v837 = vunpack.c.l.b16 %v202
  %v838 = vunpack.c.h.b16 %v202
  %v839 = vpack.c.b16 %v617, %v615
  %v840 = vpack.c.b16 %v618, %v616
  %v841 = vpack.c.b16 %v621, %v619
  %v842 = vpack.c.b16 %v622, %v620
  %v843 = vpack.c.b16 %v625, %v623
  %v844 = vpack.c.b16 %v626, %v624
  %v845 = vpack.c.b16 %v629, %v627
  %v846 = vpack.c.b16 %v630, %v628
  %v847 = vpack.c.b16 %v633, %v631
  %v848 = vpack.c.b16 %v634, %v632
  %v849 = vpack.c.b16 %v637, %v635
  %v850 = vpack.c.b16 %v638, %v636
  %v851 = vpack.c.b16 %v641, %v639
  %v852 = vpack.c.b16 %v642, %v640
  %v853 = vpack.c.b16 %v645, %v643
  %v854 = vpack.c.b16 %v646, %v644
  %v855 = vpack.c.b16 %v649, %v647
  %v856 = vpack.c.b16 %v650, %v648
  %v857 = vpack.c.b16 %v653, %v651
  %v858 = vpack.c.b16 %v654, %v652
  %v859 = vpack.c.b16 %v657, %v655
  %v860 = vpack.c.b16 %v658, %v656
  %v861 = vpack.c.b16 %v661, %v659
  %v862 = vpack.c.b16 %v662, %v660
  %v863 = vpack.c.b16 %v665, %v663
  %v864 = vpack.c.b16 %v666, %v664
  %v865 = vpack.c.b16 %v669, %v667
  %v866 = vpack.c.b16 %v670, %v668
  %v867 = vpack.c.b16 %v673, %v671
  %v868 = vpack.c.b16 %v674, %v672
  %v869 = vpack.c.b16 %v677, %v675
  %v870 = vpack.c.b16 %v678, %v676
  %v871 = vpack.c.b16 %v681, %v679
  %v872 = vpack.c.b16 %v682, %v680
  %v873 = vpack.c.b16 %v685, %v683
  %v874 = vpack.c.b16 %v686, %v684
  %v875 = vpack.c.b16 %v689, %v687
  %v876 = vpack.c.b16 %v690, %v688
  %v877 = vpack.c.b16 %v693, %v691
  %v878 = vpack.c.b16 %v694, %v692
  %v879 = vpack.c.b16 %v697, %v695
  %v880 = vpack.c.b16 %v698, %v696
  %v881 = vpack.c.b16 %v701, %v699
  %v882 = vpack.c.b16 %v702, %v700
  %v883 = vpack.c.b16 %v705, %v703
  %v884 = vpack.c.b16 %v706, %v704
  %v885 = vpack.c.b16 %v709, %v707
  %v886 = vpack.c.b16 %v710, %v708
  %v887 = vpack.c.b16 %v713, %v711
  %v888 = vpack.c.b16 %v714, %v712
  %v889 = vpack.c.b16 %v717, %v715
  %v890 = vpack.c.b16 %v718, %v716
  %v891 = vpack.c.b16 %v721, %v719
  %v892 = vpack.c.b16 %v722, %v720
  %v893 = vpack.c.b16 %v725, %v723
  %v894 = vpack.c.b16 %v726, %v724
  %v895 = vpack.c.b16 %v729, %v727
  %v896 = vpack.c.b16 %v730, %v728
  %v897 = vpack.c.b16 %v733, %v731
  %v898 = vpack.c.b16 %v734, %v732
  %v899 = vpack.c.b16 %v737, %v735
  %v900 = vpack.c.b16 %v738, %v736
  %v901 = vpack.c.b16 %v741, %v739
  %v902 = vpack.c.b16 %v742, %v740
  %v903 = vpack.c.b16 %v745, %v743
  %v904 = vpack.c.b16 %v746, %v744
  %v905 = vpack.c.b16 %v749, %v747
  %v906 = vpack.c.b16 %v750, %v748
  %v907 = vpack.c.b16 %v753, %v751
  %v908 = vpack.c.b16 %v754, %v752
  %v909 = vpack.c.b16 %v757, %v755
  %v910 = vpack.c.b16 %v758, %v756
  %v911 = vpack.c.b16 %v761, %v759
  %v912 = vpack.c.b16 %v762, %v760
  %v913 = vpack.c.b16 %v765, %v763
  %v914 = vpack.c.b16 %v766, %v764
  %v915 = vpack.c.b16 %v769, %v767
  %v916 = vpack.c.b16 %v770, %v768
  %v917 = vpack.c.b16 %v773, %v771
  %v918 = vpack.c.b16 %v774, %v772
  %v919 = vpack.c.b16 %v777, %v775
  %v920 = vpack.c.b16 %v778, %v776
  %v921 = vpack.c.b16 %v781, %v779
  %v922 = vpack.c.b16 %v782, %v780
  %v923 = vpack.c.b16 %v785, %v783
  %v924 = vpack.c.b16 %v786, %v784
  %v925 = vpack.c.b16 %v789, %v787
  %v926 = vpack.c.b16 %v790, %v788
  %v927 = vpack.c.b16 %v793, %v791
  %v928 = vpack.c.b16 %v794, %v792
  %v929 = vpack.c.b16 %v797, %v795
  %v930 = vpack.c.b16 %v798, %v796
  %v931 = vpack.c.b16 %v801, %v799
  %v932 = vpack.c.b16 %v802, %v800
  %v933 = vpack.c.b16 %v805, %v803
  %v934 = vpack.c.b16 %v806, %v804
  %v935 = vpack.c.b16 %v809, %v807
  %v936 = vpack.c.b16 %v810, %v808
  %v937 = vpack.c.b16 %v813, %v811
  %v938 = vpack.c.b16 %v814, %v812
  %v939 = vpack.c.b16 %v817, %v815
  %v940 = vpack.c.b16 %v818, %v816
  %v941 = vpack.c.b16 %v821, %v819
  %v942 = vpack.c.b16 %v822, %v820
  %v943 = vpack.c.b16 %v825, %v823
  %v944 = vpack.c.b16 %v826, %v824
  %v945 = vpack.c.b16 %v829, %v827
  %v946 = vpack.c.b16 %v830, %v828
  %v947 = vpack.c.b16 %v833, %v831
  %v948 = vpack.c.b16 %v834, %v832
  %v949 = vpack.c.b16 %v837, %v835
  %v950 = vpack.c.b16 %v838, %v836
  %1063 = vmatprep.subr.bf16.mxu0 %v840
  %1064 = vmatpush1.bf16.msra.mxu0 %v839
  %1065 = vmatprep.subr.bf16.mxu0 %v842
  %1066 = vmatpush1.bf16.msra.mxu0 %v841
  %1067 = vmatprep.subr.bf16.mxu0 %v844
  %1068 = vmatpush1.bf16.msra.mxu0 %v843
  %1069 = vmatprep.subr.bf16.mxu0 %v846
  %1070 = vmatpush1.bf16.msra.mxu0 %v845
  %1071 = vmatprep.subr.bf16.mxu0 %v848
  %1072 = vmatpush1.bf16.msra.mxu0 %v847
  %1073 = vmatprep.subr.bf16.mxu0 %v850
  %1074 = vmatpush1.bf16.msra.mxu0 %v849
  %1075 = vmatprep.subr.bf16.mxu0 %v852
  %1076 = vmatpush1.bf16.msra.mxu0 %v851
  %1077 = vmatprep.subr.bf16.mxu0 %v854
  %1078 = vmatpush1.bf16.msra.mxu0 %v853
  %1079 = vmatprep.subr.bf16.mxu0 %v856
  %1080 = vmatpush1.bf16.msra.mxu0 %v855
  %1081 = vmatprep.subr.bf16.mxu0 %v858
  %1082 = vmatpush1.bf16.msra.mxu0 %v857
  %1083 = vmatprep.subr.bf16.mxu0 %v860
  %1084 = vmatpush1.bf16.msra.mxu0 %v859
  %1085 = vmatprep.subr.bf16.mxu0 %v862
  %1086 = vmatpush1.bf16.msra.mxu0 %v861
  %1087 = vmatprep.subr.bf16.mxu0 %v864
  %1088 = vmatpush1.bf16.msra.mxu0 %v863
  %1089 = vmatprep.subr.bf16.mxu0 %v866
  %1090 = vmatpush1.bf16.msra.mxu0 %v865
  %1091 = vmatprep.subr.bf16.mxu0 %v868
  %1092 = vmatpush1.bf16.msra.mxu0 %v867
  %1093 = vmatprep.subr.bf16.mxu0 %v870
  %1094 = vmatpush1.bf16.msra.mxu0 %v869
  %1095 = vmatprep.mubr.bf16.mxu0 %v392
  %1096 = vmatmul.mubr.bf16.gmra.mrb[0].mxu0 %v391
  %v1097 = vpop.f32.mrb[0].mxu0
  %v1098 = vadd.f32 %v208, %v1097
  %v1099 = vpop.f32.mrb[0].mxu0
  %v1100 = vadd.f32 %v212, %v1099
  %v1101 = vpop.f32.mrb[0].mxu0
  %v1102 = vadd.f32 %v208, %v1101
  %v1103 = vpop.f32.mrb[0].mxu0
  %v1104 = vadd.f32 %v212, %v1103
  %1105 = vmatprep.mubr.bf16.mxu0 %v399
  %1106 = vmatmul.mubr.bf16.gmra.mrb[0].mxu0 %v398
  %v1107 = vpop.f32.mrb[0].mxu0
  %v1108 = vadd.f32 %v208, %v1107
  %v1109 = vpop.f32.mrb[0].mxu0
  %v1110 = vadd.f32 %v212, %v1109
  %v1111 = vpop.f32.mrb[0].mxu0
  %v1112 = vadd.f32 %v208, %v1111
  %v1113 = vpop.f32.mrb[0].mxu0
  %v1114 = vadd.f32 %v212, %v1113
  %1115 = vmatprep.mubr.bf16.mxu0 %v406
  %1116 = vmatmul.mubr.bf16.gmra.mrb[0].mxu0 %v405
  %v1117 = vpop.f32.mrb[0].mxu0
  %v1118 = vadd.f32 %v208, %v1117
  %v1119 = vpop.f32.mrb[0].mxu0
  %v1120 = vadd.f32 %v212, %v1119
  %v1121 = vpop.f32.mrb[0].mxu0
  %v1122 = vadd.f32 %v208, %v1121
  %v1123 = vpop.f32.mrb[0].mxu0
  %v1124 = vadd.f32 %v212, %v1123
  %1125 = vmatprep.mubr.bf16.mxu0 %v413
  %1126 = vmatmul.mubr.bf16.gmra.mrb[0].mxu0 %v412
  %v1127 = vpop.f32.mrb[0].mxu0
  %v1128 = vadd.f32 %v208, %v1127
  %v1129 = vpop.f32.mrb[0].mxu0
  %v1130 = vadd.f32 %v212, %v1129
  %v1131 = vpop.f32.mrb[0].mxu0
  %v1132 = vadd.f32 %v208, %v1131
  %v1133 = vpop.f32.mrb[0].mxu0
  %v1134 = vadd.f32 %v212, %v1133
  %1135 = vmatprep.mubr.bf16.mxu0 %v420
  %1136 = vmatmul.mubr.bf16.gmra.mrb[0].mxu0 %v419
  %v1137 = vpop.f32.mrb[0].mxu0
  %v1138 = vadd.f32 %v208, %v1137
  %v1139 = vpop.f32.mrb[0].mxu0
  %v1140 = vadd.f32 %v212, %v1139
  %v1141 = vpop.f32.mrb[0].mxu0
  %v1142 = vadd.f32 %v208, %v1141
  %v1143 = vpop.f32.mrb[0].mxu0
  %v1144 = vadd.f32 %v212, %v1143
  %1145 = vmatprep.mubr.bf16.mxu0 %v427
  %1146 = vmatmul.mubr.bf16.gmra.mrb[0].mxu0 %v426
  %v1147 = vpop.f32.mrb[0].mxu0
  %v1148 = vadd.f32 %v208, %v1147
  %v1149 = vpop.f32.mrb[0].mxu0
  %v1150 = vadd.f32 %v212, %v1149
  %v1151 = vpop.f32.mrb[0].mxu0
  %v1152 = vadd.f32 %v208, %v1151
  %v1153 = vpop.f32.mrb[0].mxu0
  %v1154 = vadd.f32 %v212, %v1153
  %1155 = vmatprep.mubr.bf16.mxu0 %v434
  %1156 = vmatmul.mubr.bf16.gmra.mrb[0].mxu0 %v433
  %v1157 = vpop.f32.mrb[0].mxu0
  %v1158 = vadd.f32 %v208, %v1157
  %v1159 = vpop.f32.mrb[0].mxu0
  %v1160 = vadd.f32 %v212, %v1159
  %v1161 = vpop.f32.mrb[0].mxu0
  %v1162 = vadd.f32 %v208, %v1161
  %v1163 = vpop.f32.mrb[0].mxu0
  %v1164 = vadd.f32 %v212, %v1163
  %1165 = vmatprep.mubr.bf16.mxu0 %v441
  %1166 = vmatmul.mubr.bf16.gmra.mrb[0].mxu0 %v440
  %v1167 = vpop.f32.mrb[0].mxu0
  %v1168 = vadd.f32 %v208, %v1167
  %v1169 = vpop.f32.mrb[0].mxu0
  %v1170 = vadd.f32 %v212, %v1169
  %v1171 = vpop.f32.mrb[0].mxu0
  %v1172 = vadd.f32 %v208, %v1171
  %v1173 = vpop.f32.mrb[0].mxu0
  %v1174 = vadd.f32 %v212, %v1173
  %1175 = vdwg.mxu0
  %1176 = vmatprep.subr.bf16.mxu0 %v872
  %1177 = vmatpush1.bf16.msra.mxu0 %v871
  %1178 = vmatprep.subr.bf16.mxu0 %v874
  %1179 = vmatpush1.bf16.msra.mxu0 %v873
  %1180 = vmatprep.subr.bf16.mxu0 %v876
  %1181 = vmatpush1.bf16.msra.mxu0 %v875
  %1182 = vmatprep.subr.bf16.mxu0 %v878
  %1183 = vmatpush1.bf16.msra.mxu0 %v877
  %1184 = vmatprep.subr.bf16.mxu0 %v880
  %1185 = vmatpush1.bf16.msra.mxu0 %v879
  %1186 = vmatprep.subr.bf16.mxu0 %v882
  %1187 = vmatpush1.bf16.msra.mxu0 %v881
  %1188 = vmatprep.subr.bf16.mxu0 %v884
  %1189 = vmatpush1.bf16.msra.mxu0 %v883
  %1190 = vmatprep.subr.bf16.mxu0 %v886
  %1191 = vmatpush1.bf16.msra.mxu0 %v885
  %1192 = vmatprep.subr.bf16.mxu0 %v888
  %1193 = vmatpush1.bf16.msra.mxu0 %v887
  %1194 = vmatprep.subr.bf16.mxu0 %v890
  %1195 = vmatpush1.bf16.msra.mxu0 %v889
  %1196 = vmatprep.subr.bf16.mxu0 %v892
  %1197 = vmatpush1.bf16.msra.mxu0 %v891
  %1198 = vmatprep.subr.bf16.mxu0 %v894
  %1199 = vmatpush1.bf16.msra.mxu0 %v893
  %1200 = vmatprep.subr.bf16.mxu0 %v896
  %1201 = vmatpush1.bf16.msra.mxu0 %v895
  %1202 = vmatprep.subr.bf16.mxu0 %v898
  %1203 = vmatpush1.bf16.msra.mxu0 %v897
  %1204 = vmatprep.subr.bf16.mxu0 %v900
  %1205 = vmatpush1.bf16.msra.mxu0 %v899
  %1206 = vmatprep.subr.bf16.mxu0 %v902
  %1207 = vmatpush1.bf16.msra.mxu0 %v901
  %1208 = vmatprep.mubr.bf16.mxu0 %v394
  %1209 = vmatmul.mubr.bf16.gmra.mrb[0].mxu0 %v393
  %v1210 = vpop.f32.mrb[0].mxu0
  %v1211 = vadd.f32 %v1098, %v1210
  %v1212 = vpop.f32.mrb[0].mxu0
  %v1213 = vadd.f32 %v1100, %v1212
  %v1214 = vpop.f32.mrb[0].mxu0
  %v1215 = vadd.f32 %v1102, %v1214
  %v1216 = vpop.f32.mrb[0].mxu0
  %v1217 = vadd.f32 %v1104, %v1216
  %1218 = vmatprep.mubr.bf16.mxu0 %v401
  %1219 = vmatmul.mubr.bf16.gmra.mrb[0].mxu0 %v400
  %v1220 = vpop.f32.mrb[0].mxu0
  %v1221 = vadd.f32 %v1108, %v1220
  %v1222 = vpop.f32.mrb[0].mxu0
  %v1223 = vadd.f32 %v1110, %v1222
  %v1224 = vpop.f32.mrb[0].mxu0
  %v1225 = vadd.f32 %v1112, %v1224
  %v1226 = vpop.f32.mrb[0].mxu0
  %v1227 = vadd.f32 %v1114, %v1226
  %1228 = vmatprep.mubr.bf16.mxu0 %v408
  %1229 = vmatmul.mubr.bf16.gmra.mrb[0].mxu0 %v407
  %v1230 = vpop.f32.mrb[0].mxu0
  %v1231 = vadd.f32 %v1118, %v1230
  %v1232 = vpop.f32.mrb[0].mxu0
  %v1233 = vadd.f32 %v1120, %v1232
  %v1234 = vpop.f32.mrb[0].mxu0
  %v1235 = vadd.f32 %v1122, %v1234
  %v1236 = vpop.f32.mrb[0].mxu0
  %v1237 = vadd.f32 %v1124, %v1236
  %1238 = vmatprep.mubr.bf16.mxu0 %v415
  %1239 = vmatmul.mubr.bf16.gmra.mrb[0].mxu0 %v414
  %v1240 = vpop.f32.mrb[0].mxu0
  %v1241 = vadd.f32 %v1128, %v1240
  %v1242 = vpop.f32.mrb[0].mxu0
  %v1243 = vadd.f32 %v1130, %v1242
  %v1244 = vpop.f32.mrb[0].mxu0
  %v1245 = vadd.f32 %v1132, %v1244
  %v1246 = vpop.f32.mrb[0].mxu0
  %v1247 = vadd.f32 %v1134, %v1246
  %1248 = vmatprep.mubr.bf16.mxu0 %v422
  %1249 = vmatmul.mubr.bf16.gmra.mrb[0].mxu0 %v421
  %v1250 = vpop.f32.mrb[0].mxu0
  %v1251 = vadd.f32 %v1138, %v1250
  %v1252 = vpop.f32.mrb[0].mxu0
  %v1253 = vadd.f32 %v1140, %v1252
  %v1254 = vpop.f32.mrb[0].mxu0
  %v1255 = vadd.f32 %v1142, %v1254
  %v1256 = vpop.f32.mrb[0].mxu0
  %v1257 = vadd.f32 %v1144, %v1256
  %1258 = vmatprep.mubr.bf16.mxu0 %v429
  %1259 = vmatmul.mubr.bf16.gmra.mrb[0].mxu0 %v428
  %v1260 = vpop.f32.mrb[0].mxu0
  %v1261 = vadd.f32 %v1148, %v1260
  %v1262 = vpop.f32.mrb[0].mxu0
  %v1263 = vadd.f32 %v1150, %v1262
  %v1264 = vpop.f32.mrb[0].mxu0
  %v1265 = vadd.f32 %v1152, %v1264
  %v1266 = vpop.f32.mrb[0].mxu0
  %v1267 = vadd.f32 %v1154, %v1266
  %1268 = vmatprep.mubr.bf16.mxu0 %v436
  %1269 = vmatmul.mubr.bf16.gmra.mrb[0].mxu0 %v435
  %v1270 = vpop.f32.mrb[0].mxu0
  %v1271 = vadd.f32 %v1158, %v1270
  %v1272 = vpop.f32.mrb[0].mxu0
  %v1273 = vadd.f32 %v1160, %v1272
  %v1274 = vpop.f32.mrb[0].mxu0
  %v1275 = vadd.f32 %v1162, %v1274
  %v1276 = vpop.f32.mrb[0].mxu0
  %v1277 = vadd.f32 %v1164, %v1276
  %1278 = vmatprep.mubr.bf16.mxu0 %v443
  %1279 = vmatmul.mubr.bf16.gmra.mrb[0].mxu0 %v442
  %v1280 = vpop.f32.mrb[0].mxu0
  %v1281 = vadd.f32 %v1168, %v1280
  %v1282 = vpop.f32.mrb[0].mxu0
  %v1283 = vadd.f32 %v1170, %v1282
  %v1284 = vpop.f32.mrb[0].mxu0
  %v1285 = vadd.f32 %v1172, %v1284
  %v1286 = vpop.f32.mrb[0].mxu0
  %v1287 = vadd.f32 %v1174, %v1286
  %1288 = vdwg.mxu0
  %1289 = vmatprep.subr.bf16.mxu0 %v904
  %1290 = vmatpush1.bf16.msra.mxu0 %v903
  %1291 = vmatprep.subr.bf16.mxu0 %v906
  %1292 = vmatpush1.bf16.msra.mxu0 %v905
  %1293 = vmatprep.subr.bf16.mxu0 %v908
  %1294 = vmatpush1.bf16.msra.mxu0 %v907
  %1295 = vmatprep.subr.bf16.mxu0 %v910
  %1296 = vmatpush1.bf16.msra.mxu0 %v909
  %1297 = vmatprep.subr.bf16.mxu0 %v912
  %1298 = vmatpush1.bf16.msra.mxu0 %v911
  %1299 = vmatprep.subr.bf16.mxu0 %v914
  %1300 = vmatpush1.bf16.msra.mxu0 %v913
  %1301 = vmatprep.subr.bf16.mxu0 %v916
  %1302 = vmatpush1.bf16.msra.mxu0 %v915
  %1303 = vmatprep.subr.bf16.mxu0 %v918
  %1304 = vmatpush1.bf16.msra.mxu0 %v917
  %1305 = vmatprep.subr.bf16.mxu0 %v920
  %1306 = vmatpush1.bf16.msra.mxu0 %v919
  %1307 = vmatprep.subr.bf16.mxu0 %v922
  %1308 = vmatpush1.bf16.msra.mxu0 %v921
  %1309 = vmatprep.subr.bf16.mxu0 %v924
  %1310 = vmatpush1.bf16.msra.mxu0 %v923
  %1311 = vmatprep.subr.bf16.mxu0 %v926
  %1312 = vmatpush1.bf16.msra.mxu0 %v925
  %1313 = vmatprep.subr.bf16.mxu0 %v928
  %1314 = vmatpush1.bf16.msra.mxu0 %v927
  %1315 = vmatprep.subr.bf16.mxu0 %v930
  %1316 = vmatpush1.bf16.msra.mxu0 %v929
  %1317 = vmatprep.subr.bf16.mxu0 %v932
  %1318 = vmatpush1.bf16.msra.mxu0 %v931
  %1319 = vmatprep.subr.bf16.mxu0 %v934
  %1320 = vmatpush1.bf16.msra.mxu0 %v933
  %1321 = vmatprep.mubr.bf16.mxu0 %v396
  %1322 = vmatmul.mubr.bf16.gmra.mrb[0].mxu0 %v395
  %v1323 = vpop.f32.mrb[0].mxu0
  %v1324 = vadd.f32 %v1211, %v1323
  %v1325 = vpop.f32.mrb[0].mxu0
  %v1326 = vadd.f32 %v1213, %v1325
  %v1327 = vpop.f32.mrb[0].mxu0
  %v1328 = vadd.f32 %v1215, %v1327
  %v1329 = vpop.f32.mrb[0].mxu0
  %v1330 = vadd.f32 %v1217, %v1329
  %1331 = vmatprep.mubr.bf16.mxu0 %v403
  %1332 = vmatmul.mubr.bf16.gmra.mrb[0].mxu0 %v402
  %v1333 = vpop.f32.mrb[0].mxu0
  %v1334 = vadd.f32 %v1221, %v1333
  %v1335 = vpop.f32.mrb[0].mxu0
  %v1336 = vadd.f32 %v1223, %v1335
  %v1337 = vpop.f32.mrb[0].mxu0
  %v1338 = vadd.f32 %v1225, %v1337
  %v1339 = vpop.f32.mrb[0].mxu0
  %v1340 = vadd.f32 %v1227, %v1339
  %1341 = vmatprep.mubr.bf16.mxu0 %v410
  %1342 = vmatmul.mubr.bf16.gmra.mrb[0].mxu0 %v409
  %v1343 = vpop.f32.mrb[0].mxu0
  %v1344 = vadd.f32 %v1231, %v1343
  %v1345 = vpop.f32.mrb[0].mxu0
  %v1346 = vadd.f32 %v1233, %v1345
  %v1347 = vpop.f32.mrb[0].mxu0
  %v1348 = vadd.f32 %v1235, %v1347
  %v1349 = vpop.f32.mrb[0].mxu0
  %v1350 = vadd.f32 %v1237, %v1349
  %1351 = vmatprep.mubr.bf16.mxu0 %v417
  %1352 = vmatmul.mubr.bf16.gmra.mrb[0].mxu0 %v416
  %v1353 = vpop.f32.mrb[0].mxu0
  %v1354 = vadd.f32 %v1241, %v1353
  %v1355 = vpop.f32.mrb[0].mxu0
  %v1356 = vadd.f32 %v1243, %v1355
  %v1357 = vpop.f32.mrb[0].mxu0
  %v1358 = vadd.f32 %v1245, %v1357
  %v1359 = vpop.f32.mrb[0].mxu0
  %v1360 = vadd.f32 %v1247, %v1359
  %1361 = vmatprep.mubr.bf16.mxu0 %v424
  %1362 = vmatmul.mubr.bf16.gmra.mrb[0].mxu0 %v423
  %v1363 = vpop.f32.mrb[0].mxu0
  %v1364 = vadd.f32 %v1251, %v1363
  %v1365 = vpop.f32.mrb[0].mxu0
  %v1366 = vadd.f32 %v1253, %v1365
  %v1367 = vpop.f32.mrb[0].mxu0
  %v1368 = vadd.f32 %v1255, %v1367
  %v1369 = vpop.f32.mrb[0].mxu0
  %v1370 = vadd.f32 %v1257, %v1369
  %1371 = vmatprep.mubr.bf16.mxu0 %v431
  %1372 = vmatmul.mubr.bf16.gmra.mrb[0].mxu0 %v430
  %v1373 = vpop.f32.mrb[0].mxu0
  %v1374 = vadd.f32 %v1261, %v1373
  %v1375 = vpop.f32.mrb[0].mxu0
  %v1376 = vadd.f32 %v1263, %v1375
  %v1377 = vpop.f32.mrb[0].mxu0
  %v1378 = vadd.f32 %v1265, %v1377
  %v1379 = vpop.f32.mrb[0].mxu0
  %v1380 = vadd.f32 %v1267, %v1379
  %1381 = vmatprep.mubr.bf16.mxu0 %v438
  %1382 = vmatmul.mubr.bf16.gmra.mrb[0].mxu0 %v437
  %v1383 = vpop.f32.mrb[0].mxu0
  %v1384 = vadd.f32 %v1271, %v1383
  %v1385 = vpop.f32.mrb[0].mxu0
  %v1386 = vadd.f32 %v1273, %v1385
  %v1387 = vpop.f32.mrb[0].mxu0
  %v1388 = vadd.f32 %v1275, %v1387
  %v1389 = vpop.f32.mrb[0].mxu0
  %v1390 = vadd.f32 %v1277, %v1389
  %1391 = vmatprep.mubr.bf16.mxu0 %v445
  %1392 = vmatmul.mubr.bf16.gmra.mrb[0].mxu0 %v444
  %v1393 = vpop.f32.mrb[0].mxu0
  %v1394 = vadd.f32 %v1281, %v1393
  %v1395 = vpop.f32.mrb[0].mxu0
  %v1396 = vadd.f32 %v1283, %v1395
  %v1397 = vpop.f32.mrb[0].mxu0
  %v1398 = vadd.f32 %v1285, %v1397
  %v1399 = vpop.f32.mrb[0].mxu0
  %v1400 = vadd.f32 %v1287, %v1399
  %1401 = vdwg.mxu0
  %1402 = vmatprep.subr.bf16.mxu0 %v936
  %1403 = vmatpush1.bf16.msra.mxu0 %v935
  %1404 = vmatprep.subr.bf16.mxu0 %v938
  %1405 = vmatpush1.bf16.msra.mxu0 %v937
  %1406 = vmatprep.subr.bf16.mxu0 %v940
  %1407 = vmatpush1.bf16.msra.mxu0 %v939
  %1408 = vmatprep.subr.bf16.mxu0 %v942
  %1409 = vmatpush1.bf16.msra.mxu0 %v941
  %1410 = vmatprep.subr.bf16.mxu0 %v944
  %1411 = vmatpush1.bf16.msra.mxu0 %v943
  %1412 = vmatprep.subr.bf16.mxu0 %v946
  %1413 = vmatpush1.bf16.msra.mxu0 %v945
  %1414 = vmatprep.subr.bf16.mxu0 %v948
  %1415 = vmatpush1.bf16.msra.mxu0 %v947
  %1416 = vmatprep.subr.bf16.mxu0 %v950
  %1417 = vmatpush1.bf16.msra.mxu0 %v949
  %1418 = vmatprep.subr.bf16.mxu0 0
  %1419 = vmatpush1.bf16.msra.mxu0 0
  %1420 = vmatprep.subr.bf16.mxu0 0
  %1421 = vmatpush1.bf16.msra.mxu0 0
  %1422 = vmatprep.subr.bf16.mxu0 0
  %1423 = vmatpush1.bf16.msra.mxu0 0
  %1424 = vmatprep.subr.bf16.mxu0 0
  %1425 = vmatpush1.bf16.msra.mxu0 0
  %1426 = vmatprep.subr.bf16.mxu0 0
  %1427 = vmatpush1.bf16.msra.mxu0 0
  %1428 = vmatprep.subr.bf16.mxu0 0
  %1429 = vmatpush1.bf16.msra.mxu0 0
  %1430 = vmatprep.subr.bf16.mxu0 0
  %1431 = vmatpush1.bf16.msra.mxu0 0
  %1432 = vmatprep.subr.bf16.mxu0 0
  %1433 = vmatpush1.bf16.msra.mxu0 0
  %1434 = vmatprep.mubr.bf16.mxu0 0
  %1435 = vmatmul.mubr.bf16.gmra.mrb[0].mxu0 %v397
  %v1436 = vpop.f32.mrb[0].mxu0
  %v1437 = vadd.f32 %v1324, %v1436
  %v1438 = vpop.f32.mrb[0].mxu0
  %v1439 = vadd.f32 %v1326, %v1438
  %v1440 = vpop.f32.mrb[0].mxu0
  %v1441 = vadd.f32 %v1328, %v1440
  %v1442 = vpop.f32.mrb[0].mxu0
  %v1443 = vadd.f32 %v1330, %v1442
  %1444 = vmatprep.mubr.bf16.mxu0 0
  %1445 = vmatmul.mubr.bf16.gmra.mrb[0].mxu0 %v404
  %v1446 = vpop.f32.mrb[0].mxu0
  %v1447 = vadd.f32 %v1334, %v1446
  %v1448 = vpop.f32.mrb[0].mxu0
  %v1449 = vadd.f32 %v1336, %v1448
  %v1450 = vpop.f32.mrb[0].mxu0
  %v1451 = vadd.f32 %v1338, %v1450
  %v1452 = vpop.f32.mrb[0].mxu0
  %v1453 = vadd.f32 %v1340, %v1452
  %1454 = vmatprep.mubr.bf16.mxu0 0
  %1455 = vmatmul.mubr.bf16.gmra.mrb[0].mxu0 %v411
  %v1456 = vpop.f32.mrb[0].mxu0
  %v1457 = vadd.f32 %v1344, %v1456
  %v1458 = vpop.f32.mrb[0].mxu0
  %v1459 = vadd.f32 %v1346, %v1458
  %v1460 = vpop.f32.mrb[0].mxu0
  %v1461 = vadd.f32 %v1348, %v1460
  %v1462 = vpop.f32.mrb[0].mxu0
  %v1463 = vadd.f32 %v1350, %v1462
  %1464 = vmatprep.mubr.bf16.mxu0 0
  %1465 = vmatmul.mubr.bf16.gmra.mrb[0].mxu0 %v418
  %v1466 = vpop.f32.mrb[0].mxu0
  %v1467 = vadd.f32 %v1354, %v1466
  %v1468 = vpop.f32.mrb[0].mxu0
  %v1469 = vadd.f32 %v1356, %v1468
  %v1470 = vpop.f32.mrb[0].mxu0
  %v1471 = vadd.f32 %v1358, %v1470
  %v1472 = vpop.f32.mrb[0].mxu0
  %v1473 = vadd.f32 %v1360, %v1472
  %1474 = vmatprep.mubr.bf16.mxu0 0
  %1475 = vmatmul.mubr.bf16.gmra.mrb[0].mxu0 %v425
  %v1476 = vpop.f32.mrb[0].mxu0
  %v1477 = vadd.f32 %v1364, %v1476
  %v1478 = vpop.f32.mrb[0].mxu0
  %v1479 = vadd.f32 %v1366, %v1478
  %v1480 = vpop.f32.mrb[0].mxu0
  %v1481 = vadd.f32 %v1368, %v1480
  %v1482 = vpop.f32.mrb[0].mxu0
  %v1483 = vadd.f32 %v1370, %v1482
  %1484 = vmatprep.mubr.bf16.mxu0 0
  %1485 = vmatmul.mubr.bf16.gmra.mrb[0].mxu0 %v432
  %v1486 = vpop.f32.mrb[0].mxu0
  %v1487 = vadd.f32 %v1374, %v1486
  %v1488 = vpop.f32.mrb[0].mxu0
  %v1489 = vadd.f32 %v1376, %v1488
  %v1490 = vpop.f32.mrb[0].mxu0
  %v1491 = vadd.f32 %v1378, %v1490
  %v1492 = vpop.f32.mrb[0].mxu0
  %v1493 = vadd.f32 %v1380, %v1492
  %1494 = vmatprep.mubr.bf16.mxu0 0
  %1495 = vmatmul.mubr.bf16.gmra.mrb[0].mxu0 %v439
  %v1496 = vpop.f32.mrb[0].mxu0
  %v1497 = vadd.f32 %v1384, %v1496
  %v1498 = vpop.f32.mrb[0].mxu0
  %v1499 = vadd.f32 %v1386, %v1498
  %v1500 = vpop.f32.mrb[0].mxu0
  %v1501 = vadd.f32 %v1388, %v1500
  %v1502 = vpop.f32.mrb[0].mxu0
  %v1503 = vadd.f32 %v1390, %v1502
  %1504 = vmatprep.mubr.bf16.mxu0 0
  %1505 = vmatmul.mubr.bf16.gmra.mrb[0].mxu0 %v446
  %v1506 = vpop.f32.mrb[0].mxu0
  %v1507 = vadd.f32 %v1394, %v1506
  %v1508 = vpop.f32.mrb[0].mxu0
  %v1509 = vadd.f32 %v1396, %v1508
  %v1510 = vpop.f32.mrb[0].mxu0
  %v1511 = vadd.f32 %v1398, %v1510
  %v1512 = vpop.f32.mrb[0].mxu0
  %v1513 = vadd.f32 %v1400, %v1512
  %1514 = vdwg.mxu0
  %v1515 = vmax.f32 %v1437, 0.0
  %v1516 = vmax.f32 %v1439, 0.0
  %v1517 = vmax.f32 %v1441, 0.0
  %v1518 = vmax.f32 %v1443, 0.0
  %v1519 = vmax.f32 %v1447, 0.0
  %v1520 = vmax.f32 %v1449, 0.0
  %v1521 = vmax.f32 %v1451, 0.0
  %v1522 = vmax.f32 %v1453, 0.0
  %v1523 = vmax.f32 %v1457, 0.0
  %v1524 = vmax.f32 %v1459, 0.0
  %v1525 = vmax.f32 %v1461, 0.0
  %v1526 = vmax.f32 %v1463, 0.0
  %v1527 = vmax.f32 %v1467, 0.0
  %v1528 = vmax.f32 %v1469, 0.0
  %v1529 = vmax.f32 %v1471, 0.0
  %v1530 = vmax.f32 %v1473, 0.0
  %v1531 = vmax.f32 %v1477, 0.0
  %v1532 = vmax.f32 %v1479, 0.0
  %v1533 = vmax.f32 %v1481, 0.0
  %v1534 = vmax.f32 %v1483, 0.0
  %v1535 = vmax.f32 %v1487, 0.0
  %v1536 = vmax.f32 %v1489, 0.0
  %v1537 = vmax.f32 %v1491, 0.0
  %v1538 = vmax.f32 %v1493, 0.0
  %v1539 = vmax.f32 %v1497, 0.0
  %v1540 = vmax.f32 %v1499, 0.0
  %v1541 = vmax.f32 %v1501, 0.0
  %v1542 = vmax.f32 %v1503, 0.0
  %v1543 = vmax.f32 %v1507, 0.0
  %v1544 = vmax.f32 %v1509, 0.0
  %v1545 = vmax.f32 %v1511, 0.0
  %v1546 = vmax.f32 %v1513, 0.0
  %v1547 = vpack.c.bf16 %v1517, %v1515
  %v1548 = vpack.c.bf16 %v1518, %v1516
  %v1549 = vpack.c.bf16 %v1521, %v1519
  %v1550 = vpack.c.bf16 %v1522, %v1520
  %v1551 = vpack.c.bf16 %v1525, %v1523
  %v1552 = vpack.c.bf16 %v1526, %v1524
  %v1553 = vpack.c.bf16 %v1529, %v1527
  %v1554 = vpack.c.bf16 %v1530, %v1528
  %v1555 = vpack.c.bf16 %v1533, %v1531
  %v1556 = vpack.c.bf16 %v1534, %v1532
  %v1557 = vpack.c.bf16 %v1537, %v1535
  %v1558 = vpack.c.bf16 %v1538, %v1536
  %v1559 = vpack.c.bf16 %v1541, %v1539
  %v1560 = vpack.c.bf16 %v1542, %v1540
  %v1561 = vpack.c.bf16 %v1545, %v1543
  %v1562 = vpack.c.bf16 %v1546, %v1544
  %v1563 = vld [vmem:[%s3] sm:$0xf]
  %v1564 = vld [vmem:[%s3 + $0x4] sm:$0xf]
  %v1565 = vld [vmem:[%s3 + $0x8] sm:$0xf]
  %v1566 = vld [vmem:[%s3 + $0xc] sm:$0xf]
  %v1567 = vld [vmem:[%s3 + $0x10] sm:$0xf]
  %v1568 = vld [vmem:[%s3 + $0x14] sm:$0xf]
  %v1569 = vld [vmem:[%s3 + $0x18] sm:$0xf]
  %v1570 = vld [vmem:[%s3 + $0x1c] sm:$0xf]
  %v1571 = vld [vmem:[%s3 + $0x20] sm:$0xf]
  %v1572 = vld [vmem:[%s3 + $0x24] sm:$0xf]
  %v1573 = vld [vmem:[%s3 + $0x28] sm:$0xf]
  %v1574 = vld [vmem:[%s3 + $0x2c] sm:$0xf]
  %v1575 = vld [vmem:[%s3 + $0x30] sm:$0xf]
  %v1576 = vld [vmem:[%s3 + $0x34] sm:$0xf]
  %v1577 = vld [vmem:[%s3 + $0x38] sm:$0xf]
  %v1578 = vld [vmem:[%s3 + $0x3c] sm:$0xf]
  %v1579 = vld [vmem:[%s3 + $0x40] sm:$0xf]
  %v1580 = vld [vmem:[%s3 + $0x44] sm:$0xf]
  %v1581 = vld [vmem:[%s3 + $0x48] sm:$0xf]
  %v1582 = vld [vmem:[%s3 + $0x4c] sm:$0xf]
  %v1583 = vld [vmem:[%s3 + $0x50] sm:$0xf]
  %v1584 = vld [vmem:[%s3 + $0x54] sm:$0xf]
  %v1585 = vld [vmem:[%s3 + $0x58] sm:$0xf]
  %v1586 = vld [vmem:[%s3 + $0x5c] sm:$0xf]
  %v1587 = vld [vmem:[%s3 + $0x60] sm:$0xf]
  %v1588 = vld [vmem:[%s3 + $0x64] sm:$0xf]
  %v1589 = vld [vmem:[%s3 + $0x68] sm:$0xf]
  %v1590 = vld [vmem:[%s3 + $0x6c] sm:$0xf]
  %v1591 = vld [vmem:[%s3 + $0x70] sm:$0xf]
  %v1592 = vld [vmem:[%s3 + $0x74] sm:$0xf]
  %v1593 = vld [vmem:[%s3 + $0x78] sm:$0xf]
  %v1594 = vld [vmem:[%s3 + $0x7c] sm:$0xf]
  %v1595 = vld [vmem:[%s4] sm:$0x1]
  %v1597 = vlaneseq
  %v1598 = vshrl.u32 %v1597, 7
  %v1599 = vsub.s32 0, %v1598
  %v1600 = vrot.slane %v1595, %v1599
  %v1634 = vunpack.c.l.b16 %v1563
  %v1635 = vunpack.c.l.b16 %v1564
  %v1636 = vunpack.c.l.b16 %v1565
  %v1637 = vunpack.c.l.b16 %v1566
  %v1638 = vunpack.c.l.b16 %v1567
  %v1639 = vunpack.c.l.b16 %v1568
  %v1640 = vunpack.c.l.b16 %v1569
  %v1641 = vunpack.c.l.b16 %v1570
  %v1642 = vunpack.c.l.b16 %v1571
  %v1643 = vunpack.c.l.b16 %v1572
  %v1644 = vunpack.c.l.b16 %v1573
  %v1645 = vunpack.c.l.b16 %v1574
  %v1646 = vunpack.c.l.b16 %v1575
  %v1647 = vunpack.c.l.b16 %v1576
  %v1648 = vunpack.c.l.b16 %v1577
  %v1649 = vunpack.c.l.b16 %v1578
  %v1650 = vunpack.c.l.b16 %v1579
  %v1651 = vunpack.c.l.b16 %v1580
  %v1652 = vunpack.c.l.b16 %v1581
  %v1653 = vunpack.c.l.b16 %v1582
  %v1654 = vunpack.c.l.b16 %v1583
  %v1655 = vunpack.c.l.b16 %v1584
  %v1656 = vunpack.c.l.b16 %v1585
  %v1657 = vunpack.c.l.b16 %v1586
  %v1658 = vunpack.c.l.b16 %v1587
  %v1659 = vunpack.c.l.b16 %v1588
  %v1660 = vunpack.c.l.b16 %v1589
  %v1661 = vunpack.c.l.b16 %v1590
  %v1662 = vunpack.c.l.b16 %v1591
  %v1663 = vunpack.c.l.b16 %v1592
  %v1664 = vunpack.c.l.b16 %v1593
  %v1665 = vunpack.c.l.b16 %v1594
  %v1666 = vpack.c.b16 %v1635, %v1634
  %v1667 = vpack.c.b16 %v1637, %v1636
  %v1668 = vpack.c.b16 %v1639, %v1638
  %v1669 = vpack.c.b16 %v1641, %v1640
  %v1670 = vpack.c.b16 %v1643, %v1642
  %v1671 = vpack.c.b16 %v1645, %v1644
  %v1672 = vpack.c.b16 %v1647, %v1646
  %v1673 = vpack.c.b16 %v1649, %v1648
  %v1674 = vpack.c.b16 %v1651, %v1650
  %v1675 = vpack.c.b16 %v1653, %v1652
  %v1676 = vpack.c.b16 %v1655, %v1654
  %v1677 = vpack.c.b16 %v1657, %v1656
  %v1678 = vpack.c.b16 %v1659, %v1658
  %v1679 = vpack.c.b16 %v1661, %v1660
  %v1680 = vpack.c.b16 %v1663, %v1662
  %v1681 = vpack.c.b16 %v1665, %v1664
  %1698 = vmatprep.subr.bf16.mxu0 0
  %1699 = vmatpush1.bf16.msra.mxu0 %v1666
  %1700 = vmatprep.subr.bf16.mxu0 0
  %1701 = vmatpush1.bf16.msra.mxu0 %v1667
  %1702 = vmatprep.subr.bf16.mxu0 0
  %1703 = vmatpush1.bf16.msra.mxu0 %v1668
  %1704 = vmatprep.subr.bf16.mxu0 0
  %1705 = vmatpush1.bf16.msra.mxu0 %v1669
  %1706 = vmatprep.subr.bf16.mxu0 0
  %1707 = vmatpush1.bf16.msra.mxu0 %v1670
  %1708 = vmatprep.subr.bf16.mxu0 0
  %1709 = vmatpush1.bf16.msra.mxu0 %v1671
  %1710 = vmatprep.subr.bf16.mxu0 0
  %1711 = vmatpush1.bf16.msra.mxu0 %v1672
  %1712 = vmatprep.subr.bf16.mxu0 0
  %1713 = vmatpush1.bf16.msra.mxu0 %v1673
  %1714 = vmatprep.subr.bf16.mxu0 0
  %1715 = vmatpush1.bf16.msra.mxu0 %v1674
  %1716 = vmatprep.subr.bf16.mxu0 0
  %1717 = vmatpush1.bf16.msra.mxu0 %v1675
  %1718 = vmatprep.subr.bf16.mxu0 0
  %1719 = vmatpush1.bf16.msra.mxu0 %v1676
  %1720 = vmatprep.subr.bf16.mxu0 0
  %1721 = vmatpush1.bf16.msra.mxu0 %v1677
  %1722 = vmatprep.subr.bf16.mxu0 0
  %1723 = vmatpush1.bf16.msra.mxu0 %v1678
  %1724 = vmatprep.subr.bf16.mxu0 0
  %1725 = vmatpush1.bf16.msra.mxu0 %v1679
  %1726 = vmatprep.subr.bf16.mxu0 0
  %1727 = vmatpush1.bf16.msra.mxu0 %v1680
  %1728 = vmatprep.subr.bf16.mxu0 0
  %1729 = vmatpush1.bf16.msra.mxu0 %v1681
  %1730 = vmatprep.mubr.bf16.mxu0 %v1548
  %1731 = vmatmul.mubr.bf16.gmra.mrb[0].mxu0 %v1547
  %v1732 = vpop.f32.mrb[0].mxu0
  %v1733 = vadd.f32 %v1600, %v1732
  %v1734 = vpop.f32.mrb[0].mxu0
  %v1735 = vpop.f32.mrb[0].mxu0
  %v1736 = vadd.f32 %v1600, %v1735
  %v1737 = vpop.f32.mrb[0].mxu0
  %1738 = vmatprep.mubr.bf16.mxu0 %v1550
  %1739 = vmatmul.mubr.bf16.gmra.mrb[0].mxu0 %v1549
  %v1740 = vpop.f32.mrb[0].mxu0
  %v1741 = vadd.f32 %v1600, %v1740
  %v1742 = vpop.f32.mrb[0].mxu0
  %v1743 = vpop.f32.mrb[0].mxu0
  %v1744 = vadd.f32 %v1600, %v1743
  %v1745 = vpop.f32.mrb[0].mxu0
  %1746 = vmatprep.mubr.bf16.mxu0 %v1552
  %1747 = vmatmul.mubr.bf16.gmra.mrb[0].mxu0 %v1551
  %v1748 = vpop.f32.mrb[0].mxu0
  %v1749 = vadd.f32 %v1600, %v1748
  %v1750 = vpop.f32.mrb[0].mxu0
  %v1751 = vpop.f32.mrb[0].mxu0
  %v1752 = vadd.f32 %v1600, %v1751
  %v1753 = vpop.f32.mrb[0].mxu0
  %1754 = vmatprep.mubr.bf16.mxu0 %v1554
  %1755 = vmatmul.mubr.bf16.gmra.mrb[0].mxu0 %v1553
  %v1756 = vpop.f32.mrb[0].mxu0
  %v1757 = vadd.f32 %v1600, %v1756
  %v1758 = vpop.f32.mrb[0].mxu0
  %v1759 = vpop.f32.mrb[0].mxu0
  %v1760 = vadd.f32 %v1600, %v1759
  %v1761 = vpop.f32.mrb[0].mxu0
  %1762 = vmatprep.mubr.bf16.mxu0 %v1556
  %1763 = vmatmul.mubr.bf16.gmra.mrb[0].mxu0 %v1555
  %v1764 = vpop.f32.mrb[0].mxu0
  %v1765 = vadd.f32 %v1600, %v1764
  %v1766 = vpop.f32.mrb[0].mxu0
  %v1767 = vpop.f32.mrb[0].mxu0
  %v1768 = vadd.f32 %v1600, %v1767
  %v1769 = vpop.f32.mrb[0].mxu0
  %1770 = vmatprep.mubr.bf16.mxu0 %v1558
  %1771 = vmatmul.mubr.bf16.gmra.mrb[0].mxu0 %v1557
  %v1772 = vpop.f32.mrb[0].mxu0
  %v1773 = vadd.f32 %v1600, %v1772
  %v1774 = vpop.f32.mrb[0].mxu0
  %v1775 = vpop.f32.mrb[0].mxu0
  %v1776 = vadd.f32 %v1600, %v1775
  %v1777 = vpop.f32.mrb[0].mxu0
  %1778 = vmatprep.mubr.bf16.mxu0 %v1560
  %1779 = vmatmul.mubr.bf16.gmra.mrb[0].mxu0 %v1559
  %v1780 = vpop.f32.mrb[0].mxu0
  %v1781 = vadd.f32 %v1600, %v1780
  %v1782 = vpop.f32.mrb[0].mxu0
  %v1783 = vpop.f32.mrb[0].mxu0
  %v1784 = vadd.f32 %v1600, %v1783
  %v1785 = vpop.f32.mrb[0].mxu0
  %1786 = vmatprep.mubr.bf16.mxu0 %v1562
  %1787 = vmatmul.mubr.bf16.gmra.mrb[0].mxu0 %v1561
  %v1788 = vpop.f32.mrb[0].mxu0
  %v1789 = vadd.f32 %v1600, %v1788
  %v1790 = vpop.f32.mrb[0].mxu0
  %v1791 = vpop.f32.mrb[0].mxu0
  %v1792 = vadd.f32 %v1600, %v1791
  %v1793 = vpop.f32.mrb[0].mxu0
  %1794 = vdwg.mxu0
  %v1795 = vmax.f32 %v1733, 0.0
  %v1796 = vmax.f32 %v1736, 0.0
  %v1797 = vmax.f32 %v1741, 0.0
  %v1798 = vmax.f32 %v1744, 0.0
  %v1799 = vmax.f32 %v1749, 0.0
  %v1800 = vmax.f32 %v1752, 0.0
  %v1801 = vmax.f32 %v1757, 0.0
  %v1802 = vmax.f32 %v1760, 0.0
  %v1803 = vmax.f32 %v1765, 0.0
  %v1804 = vmax.f32 %v1768, 0.0
  %v1805 = vmax.f32 %v1773, 0.0
  %v1806 = vmax.f32 %v1776, 0.0
  %v1807 = vmax.f32 %v1781, 0.0
  %v1808 = vmax.f32 %v1784, 0.0
  %v1809 = vmax.f32 %v1789, 0.0
  %v1810 = vmax.f32 %v1792, 0.0
  %v1811 = vpack.c.bf16 %v1796, %v1795
  %v1812 = vpack.c.bf16 %v1798, %v1797
  %v1813 = vpack.c.bf16 %v1800, %v1799
  %v1814 = vpack.c.bf16 %v1802, %v1801
  %v1815 = vpack.c.bf16 %v1804, %v1803
  %v1816 = vpack.c.bf16 %v1806, %v1805
  %v1817 = vpack.c.bf16 %v1808, %v1807
  %v1818 = vpack.c.bf16 %v1810, %v1809
  %v1819 = vld [vmem:[%s5] sm:$0xf]
  %v1820 = vld [vmem:[%s5 + $0x4] sm:$0xf]
  %v1821 = vld [vmem:[%s5 + $0x8] sm:$0xf]
  %v1822 = vld [vmem:[%s5 + $0xc] sm:$0xf]
  %v1823 = vld [vmem:[%s5 + $0x10] sm:$0xf]
  %v1824 = vld [vmem:[%s5 + $0x14] sm:$0xf]
  %v1825 = vld [vmem:[%s5 + $0x18] sm:$0xf]
  %v1826 = vld [vmem:[%s5 + $0x1c] sm:$0xf]
  %v1827 = vld [vmem:[%s5 + $0x20] sm:$0xf]
  %v1828 = vld [vmem:[%s5 + $0x24] sm:$0xf]
  %v1829 = vld [vmem:[%s5 + $0x28] sm:$0xf]
  %v1830 = vld [vmem:[%s5 + $0x2c] sm:$0xf]
  %v1831 = vld [vmem:[%s5 + $0x30] sm:$0xf]
  %v1832 = vld [vmem:[%s5 + $0x34] sm:$0xf]
  %v1833 = vld [vmem:[%s5 + $0x38] sm:$0xf]
  %v1834 = vld [vmem:[%s5 + $0x3c] sm:$0xf]
  %v1835 = vld [vmem:[%s6] sm:$0x1]
  %v1837 = vlaneseq
  %v1838 = vshrl.u32 %v1837, 7
  %v1839 = vsub.s32 0, %v1838
  %v1840 = vrot.slane %v1835, %v1839
  %v1858 = vunpack.c.l.b16 %v1819
  %v1859 = vunpack.c.l.b16 %v1820
  %v1860 = vunpack.c.l.b16 %v1821
  %v1861 = vunpack.c.l.b16 %v1822
  %v1862 = vunpack.c.l.b16 %v1823
  %v1863 = vunpack.c.l.b16 %v1824
  %v1864 = vunpack.c.l.b16 %v1825
  %v1865 = vunpack.c.l.b16 %v1826
  %v1866 = vunpack.c.l.b16 %v1827
  %v1867 = vunpack.c.l.b16 %v1828
  %v1868 = vunpack.c.l.b16 %v1829
  %v1869 = vunpack.c.l.b16 %v1830
  %v1870 = vunpack.c.l.b16 %v1831
  %v1871 = vunpack.c.l.b16 %v1832
  %v1872 = vunpack.c.l.b16 %v1833
  %v1873 = vunpack.c.l.b16 %v1834
  %v1874 = vpack.c.b16 %v1859, %v1858
  %v1875 = vpack.c.b16 %v1861, %v1860
  %v1876 = vpack.c.b16 %v1863, %v1862
  %v1877 = vpack.c.b16 %v1865, %v1864
  %v1878 = vpack.c.b16 %v1867, %v1866
  %v1879 = vpack.c.b16 %v1869, %v1868
  %v1880 = vpack.c.b16 %v1871, %v1870
  %v1881 = vpack.c.b16 %v1873, %v1872
  %1890 = vmatprep.subr.bf16.mxu0 0
  %1891 = vmatpush1.bf16.msra.mxu0 %v1874
  %1892 = vmatprep.subr.bf16.mxu0 0
  %1893 = vmatpush1.bf16.msra.mxu0 %v1875
  %1894 = vmatprep.subr.bf16.mxu0 0
  %1895 = vmatpush1.bf16.msra.mxu0 %v1876
  %1896 = vmatprep.subr.bf16.mxu0 0
  %1897 = vmatpush1.bf16.msra.mxu0 %v1877
  %1898 = vmatprep.subr.bf16.mxu0 0
  %1899 = vmatpush1.bf16.msra.mxu0 %v1878
  %1900 = vmatprep.subr.bf16.mxu0 0
  %1901 = vmatpush1.bf16.msra.mxu0 %v1879
  %1902 = vmatprep.subr.bf16.mxu0 0
  %1903 = vmatpush1.bf16.msra.mxu0 %v1880
  %1904 = vmatprep.subr.bf16.mxu0 0
  %1905 = vmatpush1.bf16.msra.mxu0 %v1881
  %1906 = vmatprep.subr.bf16.mxu0 0
  %1907 = vmatpush1.bf16.msra.mxu0 0
  %1908 = vmatprep.subr.bf16.mxu0 0
  %1909 = vmatpush1.bf16.msra.mxu0 0
  %1910 = vmatprep.subr.bf16.mxu0 0
  %1911 = vmatpush1.bf16.msra.mxu0 0
  %1912 = vmatprep.subr.bf16.mxu0 0
  %1913 = vmatpush1.bf16.msra.mxu0 0
  %1914 = vmatprep.subr.bf16.mxu0 0
  %1915 = vmatpush1.bf16.msra.mxu0 0
  %1916 = vmatprep.subr.bf16.mxu0 0
  %1917 = vmatpush1.bf16.msra.mxu0 0
  %1918 = vmatprep.subr.bf16.mxu0 0
  %1919 = vmatpush1.bf16.msra.mxu0 0
  %1920 = vmatprep.subr.bf16.mxu0 0
  %1921 = vmatpush1.bf16.msra.mxu0 0
  %1922 = vmatprep.mubr.bf16.mxu0 0
  %1923 = vmatmul.mubr.bf16.gmra.mrb[0].mxu0 %v1811
  %v1924 = vpop.f32.mrb[0].mxu0
  %v1925 = vadd.f32 %v1840, %v1924
  %v1926 = vpop.f32.mrb[0].mxu0
  %v1927 = vpop.f32.mrb[0].mxu0
  %v1928 = vadd.f32 %v1840, %v1927
  %v1929 = vpop.f32.mrb[0].mxu0
  %1930 = vmatprep.mubr.bf16.mxu0 0
  %1931 = vmatmul.mubr.bf16.gmra.mrb[0].mxu0 %v1812
  %v1932 = vpop.f32.mrb[0].mxu0
  %v1933 = vadd.f32 %v1840, %v1932
  %v1934 = vpop.f32.mrb[0].mxu0
  %v1935 = vpop.f32.mrb[0].mxu0
  %v1936 = vadd.f32 %v1840, %v1935
  %v1937 = vpop.f32.mrb[0].mxu0
  %1938 = vmatprep.mubr.bf16.mxu0 0
  %1939 = vmatmul.mubr.bf16.gmra.mrb[0].mxu0 %v1813
  %v1940 = vpop.f32.mrb[0].mxu0
  %v1941 = vadd.f32 %v1840, %v1940
  %v1942 = vpop.f32.mrb[0].mxu0
  %v1943 = vpop.f32.mrb[0].mxu0
  %v1944 = vadd.f32 %v1840, %v1943
  %v1945 = vpop.f32.mrb[0].mxu0
  %1946 = vmatprep.mubr.bf16.mxu0 0
  %1947 = vmatmul.mubr.bf16.gmra.mrb[0].mxu0 %v1814
  %v1948 = vpop.f32.mrb[0].mxu0
  %v1949 = vadd.f32 %v1840, %v1948
  %v1950 = vpop.f32.mrb[0].mxu0
  %v1951 = vpop.f32.mrb[0].mxu0
  %v1952 = vadd.f32 %v1840, %v1951
  %v1953 = vpop.f32.mrb[0].mxu0
  %1954 = vmatprep.mubr.bf16.mxu0 0
  %1955 = vmatmul.mubr.bf16.gmra.mrb[0].mxu0 %v1815
  %v1956 = vpop.f32.mrb[0].mxu0
  %v1957 = vadd.f32 %v1840, %v1956
  %v1958 = vpop.f32.mrb[0].mxu0
  %v1959 = vpop.f32.mrb[0].mxu0
  %v1960 = vadd.f32 %v1840, %v1959
  %v1961 = vpop.f32.mrb[0].mxu0
  %1962 = vmatprep.mubr.bf16.mxu0 0
  %1963 = vmatmul.mubr.bf16.gmra.mrb[0].mxu0 %v1816
  %v1964 = vpop.f32.mrb[0].mxu0
  %v1965 = vadd.f32 %v1840, %v1964
  %v1966 = vpop.f32.mrb[0].mxu0
  %v1967 = vpop.f32.mrb[0].mxu0
  %v1968 = vadd.f32 %v1840, %v1967
  %v1969 = vpop.f32.mrb[0].mxu0
  %1970 = vmatprep.mubr.bf16.mxu0 0
  %1971 = vmatmul.mubr.bf16.gmra.mrb[0].mxu0 %v1817
  %v1972 = vpop.f32.mrb[0].mxu0
  %v1973 = vadd.f32 %v1840, %v1972
  %v1974 = vpop.f32.mrb[0].mxu0
  %v1975 = vpop.f32.mrb[0].mxu0
  %v1976 = vadd.f32 %v1840, %v1975
  %v1977 = vpop.f32.mrb[0].mxu0
  %1978 = vmatprep.mubr.bf16.mxu0 0
  %1979 = vmatmul.mubr.bf16.gmra.mrb[0].mxu0 %v1818
  %v1980 = vpop.f32.mrb[0].mxu0
  %v1981 = vadd.f32 %v1840, %v1980
  %v1982 = vpop.f32.mrb[0].mxu0
  %v1983 = vpop.f32.mrb[0].mxu0
  %v1984 = vadd.f32 %v1840, %v1983
  %v1985 = vpop.f32.mrb[0].mxu0
  %1986 = vdwg.mxu0
  %1987 = vst [vmem:[%s7] sm:$0xff] %v1925
  %1988 = vst [vmem:[%s7 + $0x8] sm:$0xff] %v1928
  %1989 = vst [vmem:[%s7 + $0x10] sm:$0xff] %v1933
  %1990 = vst [vmem:[%s7 + $0x18] sm:$0xff] %v1936
  %1991 = vst [vmem:[%s7 + $0x20] sm:$0xff] %v1941
  %1992 = vst [vmem:[%s7 + $0x28] sm:$0xff] %v1944
  %1993 = vst [vmem:[%s7 + $0x30] sm:$0xff] %v1949
  %1994 = vst [vmem:[%s7 + $0x38] sm:$0xff] %v1952
  %1995 = vst [vmem:[%s7 + $0x40] sm:$0xff] %v1957
  %1996 = vst [vmem:[%s7 + $0x48] sm:$0xff] %v1960
  %1997 = vst [vmem:[%s7 + $0x50] sm:$0xff] %v1965
  %1998 = vst [vmem:[%s7 + $0x58] sm:$0xff] %v1968
  %1999 = vst [vmem:[%s7 + $0x60] sm:$0xff] %v1973
  %2000 = vst [vmem:[%s7 + $0x68] sm:$0xff] %v1976
  %2001 = vst [vmem:[%s7 + $0x70] sm:$0xff] %v1981
  %2002 = vst [vmem:[%s7 + $0x78] sm:$0xff] %v1984
  // Predicated region
  $region30: #{mlp_forward.1} parent=0 // pred_check
    _
  $region31: #{mlp_forward.1} parent=0 // pred_check_branch
    %2004 = sbr.rel (0) target = $region33
  $region32: #{mlp_forward.1} parent=0 // pred_region
    _
  $region33: #{mlp_forward.1} parent=0 // pred_fallthru
    _
  // Predicated region
  $region34: #{mlp_forward.1} parent=0 // pred_check
    _
  $region35: #{mlp_forward.1} parent=0 // pred_check_branch
    %2006 = sbr.rel (0) target = $region37
  $region36: #{mlp_forward.1} parent=0 // pred_region
    _
  $region37: #{mlp_forward.1} parent=0 // pred_fallthru
    _

</llo_original>
